<compile_context>
chip_gen: v7x
topology: tpu7x:2x2x1
jax: 0.10.0
libtpu: 0.0.40
codegen_flags: <defaults>
</compile_context>

<pallas_src>
import math
import jax
import jax.numpy as jnp
from jax import lax
from jax.experimental import pallas as pl
from jax.experimental.pallas import tpu as pltpu

# ----- hyper-parameters (small, consistent with the module) -----------------
D_MODEL = 32
D_STATE = 8
D_CONV = 4
EXPAND = 2
D_INNER = EXPAND * D_MODEL            # 64
DT_RANK = math.ceil(D_MODEL / 16)     # 2
SEQ_LEN = 8
BATCH = 2
LN_EPS = 1e-6

DI = D_INNER                          # 64
DI2 = 2 * D_INNER                     # 128  (lane-packed: [fwd | bwd])
S = D_STATE                           # 8
BL = BATCH * SEQ_LEN                  # 16   rows per modality
MB = 2 * BATCH                        # 4    (modality, batch) groups
R = 2 * BL                            # 32   total matmul rows (both modalities)
PROJ_COLS = 256                       # [dt_f|dt_b | B_f|B_b | C_f|C_b | pad]
SLAB_ROWS = 24                        # packed small-parameter slab rows


def _silu(x):
    return x * (1.0 / (1.0 + jnp.exp(-x)))


def _softplus(x):
    return jnp.where(x > 20.0, x, jnp.log(1.0 + jnp.exp(jnp.minimum(x, 20.0))))


def _flip_time(x):
    """Reverse axis 1 (time) via static slices (guaranteed Mosaic lowering)."""
    L = x.shape[1]
    return jnp.concatenate([x[:, t:t + 1, :] for t in range(L - 1, -1, -1)],
                           axis=1)


# ----------------------------- Pallas kernel --------------------------------
def _mm_bimamba_kernel(a_ref,      # (BL, d_model)   audio rows
                       v_ref,      # (BL, d_model)   video rows
                       w_in_ref,   # (d_model, 2*d_inner)   [x-half | z-half]
                       w_proj_ref, # (2*d_inner, 256)  block-diag fused dt|B|C
                       w_out_ref,  # (d_inner, d_model)
                       slab_ref,   # (SLAB_ROWS, 128)  small params, lanes [fwd|bwd]
                       ln_ref,     # (8, d_model)  rows [g1, b1, g2, b2, 0...]
                       a_out_ref,  # (BL, d_model)
                       v_out_ref): # (BL, d_model)
    L = SEQ_LEN

    # ---- packed small params (8-row aligned groups, lanes = [fwd | bwd]) ----
    a_pk = slab_ref[0:S, :]                     # (8, 128)  A = -exp(A_log)
    cw_pk = slab_ref[8:8 + D_CONV, :]           # (4, 128)  depthwise conv weights
    vecs = slab_ref[16:24, :]                   # (8, 128)  bias rows (one tile read)
    cb_pk = vecs[0:1, :]                        # conv bias
    bdt_pk = vecs[1:2, :]                       # dt bias
    d_pk = vecs[2:3, :]                         # skip (D)

    a_x = a_ref[...]                            # (16, 32)
    v_x = v_ref[...]
    x_all = jnp.concatenate([a_x, v_x], axis=0)          # (32, 32) [audio; video]

    # ---- fused input projection: ONE MXU pass, lane-dense 128-wide result ----
    proj = jnp.dot(x_all, w_in_ref[...], preferred_element_type=jnp.float32)
    x_in = proj[:, 0:DI]                                  # (32, 64)
    z = proj[:, DI:DI2]                                   # (32, 64)

    x3 = x_in.reshape(MB, L, DI)                          # (4, 8, 64)
    # lane-pack: lanes 0:64 = forward stream, lanes 64:128 = time-reversed stream
    xp = jnp.concatenate([x3, _flip_time(x3)], axis=-1)   # (4, 8, 128)

    # ---- one causal depthwise conv covers BOTH directions (bwd pre-flipped) ----
    zpad = jnp.zeros((MB, D_CONV - 1, DI2), jnp.float32)
    xpad = jnp.concatenate([zpad, xp], axis=1)            # (4, 11, 128)
    acc = cb_pk + xpad[:, 0:L, :] * cw_pk[0:1, :]
    for k in range(1, D_CONV):
        acc = acc + xpad[:, k:k + L, :] * cw_pk[k:k + 1, :]
    xc = _silu(acc)                                       # (4, 8, 128)

    # ---- fused SSM projections: dt|B|C, both directions, ONE matmul ----
    xc2 = xc.reshape(R, DI2)                              # (32, 128)
    pr = jnp.dot(xc2, w_proj_ref[...], preferred_element_type=jnp.float32)  # (32, 256)
    dt2 = _softplus(pr[:, 0:DI2] + bdt_pk)                # (32, 128)  lane-packed dt
    bm2 = pr[:, DI2:DI2 + 2 * S]                          # (32, 16)   [B_f | B_b]
    cm2 = pr[:, DI2 + 2 * S:DI2 + 4 * S]                  # (32, 16)   [C_f | C_b]

    dt3 = dt2.reshape(MB, L, DI2)                         # (4, 8, 128)
    dtx = dt3 * xc                                        # (4, 8, 128)
    bm3 = bm2.reshape(MB, L, 2 * S)                       # (4, 8, 16)
    cm3 = cm2.reshape(MB, L, 2 * S)

    # ---- single lane-packed selective scan (fwd + bwd simultaneously) ----
    h = jnp.zeros((MB, S, DI2), jnp.float32)              # (4, 8, 128)
    ys = []
    for t in range(L):
        # exp stream is lane-dense: each push is a full (8,128) vreg
        da_t = jnp.exp(dt3[:, t, None, :] * a_pk[None, :, :])      # (4, 8, 128)
        b_t = bm3[:, t, :]                                          # (4, 16)
        c_t = cm3[:, t, :]
        b_bc = jnp.concatenate(
            [jnp.broadcast_to(b_t[:, 0:S, None], (MB, S, DI)),
             jnp.broadcast_to(b_t[:, S:2 * S, None], (MB, S, DI))], axis=-1)
        c_bc = jnp.concatenate(
            [jnp.broadcast_to(c_t[:, 0:S, None], (MB, S, DI)),
             jnp.broadcast_to(c_t[:, S:2 * S, None], (MB, S, DI))], axis=-1)
        h = da_t * h + b_bc * dtx[:, t, None, :]
        ys.append(jnp.sum(h * c_bc, axis=1))                        # (4, 128)
    y = jnp.stack(ys, axis=1) + d_pk * xc                           # (4, 8, 128)

    # un-pack directions: flip the bwd half back to original time order
    y_sum = y[:, :, 0:DI] + _flip_time(y[:, :, DI:DI2])             # (4, 8, 64)

    # ---- gate, out_proj, per-modality LayerNorm + residual ----
    gated = (y_sum * _silu(z.reshape(MB, L, DI))).reshape(R, DI)    # (32, 64)
    out1 = jnp.dot(gated, w_out_ref[...], preferred_element_type=jnp.float32)  # (32, 32)

    mu = jnp.mean(out1, axis=-1, keepdims=True)
    var = jnp.mean((out1 - mu) ** 2, axis=-1, keepdims=True)
    normed = (out1 - mu) * lax.rsqrt(var + LN_EPS)

    a_out_ref[...] = a_x + normed[0:BL, :] * ln_ref[0:1, :] + ln_ref[1:2, :]
    v_out_ref[...] = v_x + normed[BL:R, :] * ln_ref[2:3, :] + ln_ref[3:4, :]


# --------------------------- parameter packing (ONCE at init) ----------------
def pack_params(p, ln):
    """Pack raw module parameters into kernel-friendly slabs.  Call once."""
    def fuse_dir(w_x, w_dt):
        w_dtfull = jnp.dot(w_x[:, :DT_RANK], w_dt)                 # (DI, DI)
        w_b = w_x[:, DT_RANK:DT_RANK + D_STATE]                    # (DI, S)
        w_c = w_x[:, DT_RANK + D_STATE:DT_RANK + 2 * D_STATE]      # (DI, S)
        return w_dtfull, w_b, w_c

    wdt_f, wb_f, wc_f = fuse_dir(p['w_x'], p['w_dt'])
    wdt_b, wb_b, wc_b = fuse_dir(p['w_x_b'], p['w_dt_b'])

    # block-diagonal fused projection: columns [dt_f|dt_b | B_f|B_b | C_f|C_b | pad]
    w_proj = jnp.zeros((DI2, PROJ_COLS), jnp.float32)
    w_proj = w_proj.at[0:DI, 0:DI].set(wdt_f)
    w_proj = w_proj.at[DI:DI2, DI:DI2].set(wdt_b)
    w_proj = w_proj.at[0:DI, DI2:DI2 + S].set(wb_f)
    w_proj = w_proj.at[DI:DI2, DI2 + S:DI2 + 2 * S].set(wb_b)
    w_proj = w_proj.at[0:DI, DI2 + 2 * S:DI2 + 3 * S].set(wc_f)
    w_proj = w_proj.at[DI:DI2, DI2 + 3 * S:DI2 + 4 * S].set(wc_b)

    # small-parameter slab, 8-row aligned groups, lanes = [fwd | bwd]
    slab = jnp.zeros((SLAB_ROWS, DI2), jnp.float32)
    slab = slab.at[0:S, 0:DI].set(-jnp.exp(p['a_log']))
    slab = slab.at[0:S, DI:DI2].set(-jnp.exp(p['a_b_log']))
    slab = slab.at[8:8 + D_CONV, 0:DI].set(p['conv_w'])
    slab = slab.at[8:8 + D_CONV, DI:DI2].set(p['conv_w_b'])
    slab = slab.at[16, 0:DI].set(p['conv_b'][0])
    slab = slab.at[16, DI:DI2].set(p['conv_b_b'][0])
    slab = slab.at[17, 0:DI].set(p['b_dt'][0])
    slab = slab.at[17, DI:DI2].set(p['b_dt_b'][0])
    slab = slab.at[18, 0:DI].set(p['d'][0])
    slab = slab.at[18, DI:DI2].set(p['d_b'][0])

    ln_pack = jnp.zeros((8, D_MODEL), jnp.float32)
    ln_pack = ln_pack.at[0].set(ln['g1'][0])
    ln_pack = ln_pack.at[1].set(ln['b1'][0])
    ln_pack = ln_pack.at[2].set(ln['g2'][0])
    ln_pack = ln_pack.at[3].set(ln['b2'][0])

    return dict(w_in=p['w_in'].astype(jnp.float32),
                w_proj=w_proj,
                w_out=p['w_out'].astype(jnp.float32),
                slab=slab,
                ln=ln_pack)


# ------------------------------ wrapper --------------------------------------
@jax.jit
def mm_mamba_encoder_layer(a_x, v_x, packed):
    """Forward pass of MMMambaEncoderLayer: (a_out, v_out)."""
    B, L, D = a_x.shape
    assert (B, L, D) == (BATCH, SEQ_LEN, D_MODEL)
    a2 = a_x.reshape(BL, D).astype(jnp.float32)
    v2 = v_x.reshape(BL, D).astype(jnp.float32)

    a_out, v_out = pl.pallas_call(
        _mm_bimamba_kernel,
        out_shape=(jax.ShapeDtypeStruct((BL, D), jnp.float32),
                   jax.ShapeDtypeStruct((BL, D), jnp.float32)),
        grid=(1,),                                       # collapsed single step
        in_specs=[
            pl.BlockSpec((BL, D), lambda i: (0, 0)),                 # a rows
            pl.BlockSpec((BL, D), lambda i: (0, 0)),                 # v rows
            pl.BlockSpec((D_MODEL, 2 * D_INNER), lambda i: (0, 0)),  # w_in
            pl.BlockSpec((DI2, PROJ_COLS), lambda i: (0, 0)),        # w_proj
            pl.BlockSpec((D_INNER, D_MODEL), lambda i: (0, 0)),      # w_out
            pl.BlockSpec((SLAB_ROWS, DI2), lambda i: (0, 0)),        # slab
            pl.BlockSpec((8, D_MODEL), lambda i: (0, 0)),            # LN params
        ],
        out_specs=(pl.BlockSpec((BL, D), lambda i: (0, 0)),
                   pl.BlockSpec((BL, D), lambda i: (0, 0))),
        compiler_params=pltpu.CompilerParams(
            dimension_semantics=("arbitrary",)),
    )(a2, v2, packed['w_in'], packed['w_proj'], packed['w_out'],
      packed['slab'], packed['ln'])

    return a_out.reshape(B, L, D), v_out.reshape(B, L, D)


# ---------------------- pure-JAX reference (for verification) ----------------
def _ref_direction(x_in3, conv_w, conv_b, w_x, w_dt, b_dt, a_log, d_skip):
    B_, L_, _ = x_in3.shape
    pad = jnp.zeros((B_, D_CONV - 1, D_INNER), jnp.float32)
    xp = jnp.concatenate([pad, x_in3], axis=1)
    acc = conv_b[0][None, None, :]
    for k in range(D_CONV):
        acc = acc + xp[:, k:k + L_, :] * conv_w[k][None, None, :]
    xc = jax.nn.silu(acc)
    xdbl = jnp.einsum('bld,de->ble', xc, w_x)
    dt = jax.nn.softplus(jnp.einsum('blr,rd->bld', xdbl[..., :DT_RANK], w_dt)
                         + b_dt[0][None, None, :])
    Bm = xdbl[..., DT_RANK:DT_RANK + D_STATE]
    Cm = xdbl[..., DT_RANK + D_STATE:DT_RANK + 2 * D_STATE]
    A = -jnp.exp(a_log)
    h = jnp.zeros((B_, D_STATE, D_INNER), jnp.float32)
    ys = []
    for t in range(L_):
        da = jnp.exp(dt[:, t, None, :] * A[None, :, :])
        h = da * h + Bm[:, t, :, None] * (dt[:, t, :] * xc[:, t, :])[:, None, :]
        ys.append(jnp.sum(h * Cm[:, t, :, None], axis=1))
    return jnp.stack(ys, axis=1) + d_skip[0][None, None, :] * xc


def mm_mamba_reference(a_x, v_x, p, ln):
    def one(x, gamma, beta):
        B_, L_, _ = x.shape
        proj = x.reshape(B_ * L_, D_MODEL) @ p['w_in']
        x_in = proj[:, :D_INNER].reshape(B_, L_, D_INNER)
        z = proj[:, D_INNER:].reshape(B_, L_, D_INNER)
        y_f = _ref_direction(x_in, p['conv_w'], p['conv_b'], p['w_x'],
                             p['w_dt'], p['b_dt'], p['a_log'], p['d'])
        y_b = _ref_direction(x_in[:, ::-1, :], p['conv_w_b'], p['conv_b_b'],
                             p['w_x_b'], p['w_dt_b'], p['b_dt_b'],
                             p['a_b_log'], p['d_b'])[:, ::-1, :]
        out1 = jnp.einsum('bld,de->ble', (y_f + y_b) * jax.nn.silu(z), p['w_out'])
        mu = out1.mean(-1, keepdims=True)
        var = ((out1 - mu) ** 2).mean(-1, keepdims=True)
        normed = (out1 - mu) / jnp.sqrt(var + LN_EPS)
        return x + normed * gamma[0][None, None, :] + beta[0][None, None, :]

    return one(a_x, ln['g1'], ln['b1']), one(v_x, ln['g2'], ln['b2'])


# ---------------------- deterministic parameter init -------------------------
def init_params(key):
    ks = jax.random.split(key, 8)

    def nrm(k, shape, scale):
        return (scale * jax.random.normal(k, shape)).astype(jnp.float32)

    a_log = jnp.tile(
        jnp.log(jnp.arange(1, D_STATE + 1, dtype=jnp.float32))[:, None],
        (1, D_INNER))                                   # (d_state, d_inner)

    p = dict(
        w_in=nrm(ks[0], (D_MODEL, 2 * D_INNER), 0.02),
        conv_w=nrm(ks[1], (D_CONV, D_INNER), 0.1),
        conv_b=jnp.zeros((1, D_INNER), jnp.float32),
        w_x=nrm(ks[2], (D_INNER, DT_RANK + 2 * D_STATE), 0.02),
        w_dt=nrm(ks[3], (DT_RANK, D_INNER), 0.1),
        b_dt=jnp.full((1, D_INNER), -3.0, jnp.float32),   # softplus(-3) ~ 0.049
        a_log=a_log,
        d=jnp.ones((1, D_INNER), jnp.float32),
        conv_w_b=nrm(ks[4], (D_CONV, D_INNER), 0.1),
        conv_b_b=jnp.zeros((1, D_INNER), jnp.float32),
        w_x_b=nrm(ks[5], (D_INNER, DT_RANK + 2 * D_STATE), 0.02),
        w_dt_b=nrm(ks[6], (DT_RANK, D_INNER), 0.1),
        b_dt_b=jnp.full((1, D_INNER), -3.0, jnp.float32),
        a_b_log=a_log,
        d_b=jnp.ones((1, D_INNER), jnp.float32),
        w_out=nrm(ks[7], (D_INNER, D_MODEL), 0.02),
    )
    ln = dict(
        g1=jnp.ones((1, D_MODEL), jnp.float32),
        b1=jnp.zeros((1, D_MODEL), jnp.float32),
        g2=jnp.ones((1, D_MODEL), jnp.float32),
        b2=jnp.zeros((1, D_MODEL), jnp.float32),
    )
    return p, ln


if __name__ == "__main__":
    key = jax.random.PRNGKey(0)
    k_a, k_v, k_p = jax.random.split(key, 3)
    a_x = jax.random.normal(k_a, (BATCH, SEQ_LEN, D_MODEL), jnp.float32)
    v_x = jax.random.normal(k_v, (BATCH, SEQ_LEN, D_MODEL), jnp.float32)

    params, ln_params = init_params(k_p)
    packed = pack_params(params, ln_params)           # hoisted out of call path

    a_out, v_out = mm_mamba_encoder_layer(a_x, v_x, packed)
    jax.block_until_ready((a_out, v_out))

    a_ref, v_ref = mm_mamba_reference(a_x, v_x, params, ln_params)

    assert a_out.shape == a_x.shape and v_out.shape == v_x.shape
    assert bool(jnp.isfinite(a_out).all()) and bool(jnp.isfinite(v_out).all())
    assert bool(jnp.allclose(a_out, a_ref, atol=2e-2, rtol=2e-2))
    assert bool(jnp.allclose(v_out, v_ref, atol=2e-2, rtol=2e-2))
    print("KERNEL_OK")
</pallas_src>

<mosaic_0001>
module attributes {stable_mosaic.version = 11 : i64} {
  func.func @_mm_bimamba_kernel(%arg0: i32, %arg1: memref<16x32xf32, #tpu.memory_space<vmem>>, %arg2: memref<16x32xf32, #tpu.memory_space<vmem>>, %arg3: memref<32x128xf32, #tpu.memory_space<vmem>>, %arg4: memref<128x256xf32, #tpu.memory_space<vmem>>, %arg5: memref<64x32xf32, #tpu.memory_space<vmem>>, %arg6: memref<24x128xf32, #tpu.memory_space<vmem>>, %arg7: memref<8x32xf32, #tpu.memory_space<vmem>>, %arg8: memref<16x32xf32, #tpu.memory_space<vmem>>, %arg9: memref<16x32xf32, #tpu.memory_space<vmem>>) attributes {dimension_semantics = [#tpu.dimension_semantics<arbitrary>], iteration_bounds = array<i64: 1>, scalar_prefetch = 0 : i64, scratch_operands = 0 : i64, tpu.core_type = #tpu.core_type<tc>, window_params = [{pipeline_mode = #tpu.pipeline_mode<synchronous>, transform_indices = @transform_0, window_bounds = array<i64: 16, 32>}, {pipeline_mode = #tpu.pipeline_mode<synchronous>, transform_indices = @transform_1, window_bounds = array<i64: 16, 32>}, {pipeline_mode = #tpu.pipeline_mode<synchronous>, transform_indices = @transform_2, window_bounds = array<i64: 32, 128>}, {pipeline_mode = #tpu.pipeline_mode<synchronous>, transform_indices = @transform_3, window_bounds = array<i64: 128, 256>}, {pipeline_mode = #tpu.pipeline_mode<synchronous>, transform_indices = @transform_4, window_bounds = array<i64: 64, 32>}, {pipeline_mode = #tpu.pipeline_mode<synchronous>, transform_indices = @transform_5, window_bounds = array<i64: 24, 128>}, {pipeline_mode = #tpu.pipeline_mode<synchronous>, transform_indices = @transform_6, window_bounds = array<i64: 8, 32>}, {pipeline_mode = #tpu.pipeline_mode<synchronous>, transform_indices = @transform_7, window_bounds = array<i64: 16, 32>}, {pipeline_mode = #tpu.pipeline_mode<synchronous>, transform_indices = @transform_8, window_bounds = array<i64: 16, 32>}]} {
    %c0 = arith.constant 0 : index
    %c0_0 = arith.constant 0 : index
    %0 = vector.load %arg6[%c0, %c0_0] : memref<24x128xf32, #tpu.memory_space<vmem>>, vector<8x128xf32>
    %c8 = arith.constant 8 : index
    %c0_1 = arith.constant 0 : index
    %1 = vector.load %arg6[%c8, %c0_1] : memref<24x128xf32, #tpu.memory_space<vmem>>, vector<4x128xf32>
    %c16 = arith.constant 16 : index
    %c0_2 = arith.constant 0 : index
    %2 = vector.load %arg6[%c16, %c0_2] : memref<24x128xf32, #tpu.memory_space<vmem>>, vector<8x128xf32>
    %3 = vector.extract_strided_slice %2 {offsets = [0, 0], sizes = [1, 128], strides = [1, 1]} : vector<8x128xf32> to vector<1x128xf32>
    %4 = vector.extract_strided_slice %2 {offsets = [1, 0], sizes = [1, 128], strides = [1, 1]} : vector<8x128xf32> to vector<1x128xf32>
    %5 = vector.extract_strided_slice %2 {offsets = [2, 0], sizes = [1, 128], strides = [1, 1]} : vector<8x128xf32> to vector<1x128xf32>
    %c0_3 = arith.constant 0 : index
    %c0_4 = arith.constant 0 : index
    %6 = vector.load %arg1[%c0_3, %c0_4] : memref<16x32xf32, #tpu.memory_space<vmem>>, vector<16x32xf32>
    %c0_5 = arith.constant 0 : index
    %c0_6 = arith.constant 0 : index
    %7 = vector.load %arg2[%c0_5, %c0_6] : memref<16x32xf32, #tpu.memory_space<vmem>>, vector<16x32xf32>
    %8 = tpu.concatenate %6, %7 in 0 : vector<16x32xf32>, vector<16x32xf32> -> vector<32x32xf32>
    %c0_7 = arith.constant 0 : index
    %c0_8 = arith.constant 0 : index
    %9 = vector.load %arg3[%c0_7, %c0_8] : memref<32x128xf32, #tpu.memory_space<vmem>>, vector<32x128xf32>
    %cst = arith.constant dense<0.000000e+00> : vector<32x128xf32>
    %10 = tpu.matmul %8, %9, %cst {dimension_numbers = #tpu.dot_dimension_numbers<[1], [0], [0], [1], [0, 0, 1, 1], [], []>} : vector<32x32xf32>, vector<32x128xf32>, vector<32x128xf32> -> vector<32x128xf32>
    %11 = vector.extract_strided_slice %10 {offsets = [0, 0], sizes = [32, 64], strides = [1, 1]} : vector<32x128xf32> to vector<32x64xf32>
    %12 = vector.extract_strided_slice %10 {offsets = [0, 64], sizes = [32, 64], strides = [1, 1]} : vector<32x128xf32> to vector<32x64xf32>
    %13 = vector.shape_cast %11 : vector<32x64xf32> to vector<4x8x64xf32>
    %14 = vector.extract_strided_slice %13 {offsets = [0, 7, 0], sizes = [4, 1, 64], strides = [1, 1, 1]} : vector<4x8x64xf32> to vector<4x1x64xf32>
    %15 = vector.extract_strided_slice %13 {offsets = [0, 6, 0], sizes = [4, 1, 64], strides = [1, 1, 1]} : vector<4x8x64xf32> to vector<4x1x64xf32>
    %16 = vector.extract_strided_slice %13 {offsets = [0, 5, 0], sizes = [4, 1, 64], strides = [1, 1, 1]} : vector<4x8x64xf32> to vector<4x1x64xf32>
    %17 = vector.extract_strided_slice %13 {offsets = [0, 4, 0], sizes = [4, 1, 64], strides = [1, 1, 1]} : vector<4x8x64xf32> to vector<4x1x64xf32>
    %18 = vector.extract_strided_slice %13 {offsets = [0, 3, 0], sizes = [4, 1, 64], strides = [1, 1, 1]} : vector<4x8x64xf32> to vector<4x1x64xf32>
    %19 = vector.extract_strided_slice %13 {offsets = [0, 2, 0], sizes = [4, 1, 64], strides = [1, 1, 1]} : vector<4x8x64xf32> to vector<4x1x64xf32>
    %20 = vector.extract_strided_slice %13 {offsets = [0, 1, 0], sizes = [4, 1, 64], strides = [1, 1, 1]} : vector<4x8x64xf32> to vector<4x1x64xf32>
    %21 = vector.extract_strided_slice %13 {offsets = [0, 0, 0], sizes = [4, 1, 64], strides = [1, 1, 1]} : vector<4x8x64xf32> to vector<4x1x64xf32>
    %22 = tpu.concatenate %14, %15, %16, %17, %18, %19, %20, %21 in 1 : vector<4x1x64xf32>, vector<4x1x64xf32>, vector<4x1x64xf32>, vector<4x1x64xf32>, vector<4x1x64xf32>, vector<4x1x64xf32>, vector<4x1x64xf32>, vector<4x1x64xf32> -> vector<4x8x64xf32>
    %23 = tpu.concatenate %13, %22 in 2 : vector<4x8x64xf32>, vector<4x8x64xf32> -> vector<4x8x128xf32>
    %cst_9 = arith.constant 0.000000e+00 : f32
    %24 = vector.broadcast %cst_9 : f32 to vector<4x3x128xf32>
    %25 = tpu.concatenate %24, %23 in 1 : vector<4x3x128xf32>, vector<4x8x128xf32> -> vector<4x11x128xf32>
    %26 = vector.extract_strided_slice %25 {offsets = [0, 0, 0], sizes = [4, 8, 128], strides = [1, 1, 1]} : vector<4x11x128xf32> to vector<4x8x128xf32>
    %27 = vector.extract_strided_slice %1 {offsets = [0, 0], sizes = [1, 128], strides = [1, 1]} : vector<4x128xf32> to vector<1x128xf32>
    %28 = vector.shape_cast %27 : vector<1x128xf32> to vector<1x1x128xf32>
    %29 = vector.broadcast %28 : vector<1x1x128xf32> to vector<4x8x128xf32>
    %30 = arith.mulf %26, %29 : vector<4x8x128xf32>
    %31 = vector.shape_cast %3 : vector<1x128xf32> to vector<1x1x128xf32>
    %32 = vector.broadcast %31 : vector<1x1x128xf32> to vector<4x8x128xf32>
    %33 = arith.addf %32, %30 : vector<4x8x128xf32>
    %34 = vector.extract_strided_slice %25 {offsets = [0, 1, 0], sizes = [4, 8, 128], strides = [1, 1, 1]} : vector<4x11x128xf32> to vector<4x8x128xf32>
    %35 = vector.extract_strided_slice %1 {offsets = [1, 0], sizes = [1, 128], strides = [1, 1]} : vector<4x128xf32> to vector<1x128xf32>
    %36 = vector.shape_cast %35 : vector<1x128xf32> to vector<1x1x128xf32>
    %37 = vector.broadcast %36 : vector<1x1x128xf32> to vector<4x8x128xf32>
    %38 = arith.mulf %34, %37 : vector<4x8x128xf32>
    %39 = arith.addf %33, %38 : vector<4x8x128xf32>
    %40 = vector.extract_strided_slice %25 {offsets = [0, 2, 0], sizes = [4, 8, 128], strides = [1, 1, 1]} : vector<4x11x128xf32> to vector<4x8x128xf32>
    %41 = vector.extract_strided_slice %1 {offsets = [2, 0], sizes = [1, 128], strides = [1, 1]} : vector<4x128xf32> to vector<1x128xf32>
    %42 = vector.shape_cast %41 : vector<1x128xf32> to vector<1x1x128xf32>
    %43 = vector.broadcast %42 : vector<1x1x128xf32> to vector<4x8x128xf32>
    %44 = arith.mulf %40, %43 : vector<4x8x128xf32>
    %45 = arith.addf %39, %44 : vector<4x8x128xf32>
    %46 = vector.extract_strided_slice %25 {offsets = [0, 3, 0], sizes = [4, 8, 128], strides = [1, 1, 1]} : vector<4x11x128xf32> to vector<4x8x128xf32>
    %47 = vector.extract_strided_slice %1 {offsets = [3, 0], sizes = [1, 128], strides = [1, 1]} : vector<4x128xf32> to vector<1x128xf32>
    %48 = vector.shape_cast %47 : vector<1x128xf32> to vector<1x1x128xf32>
    %49 = vector.broadcast %48 : vector<1x1x128xf32> to vector<4x8x128xf32>
    %50 = arith.mulf %46, %49 : vector<4x8x128xf32>
    %51 = arith.addf %45, %50 : vector<4x8x128xf32>
    %cst_10 = arith.constant 0.000000e+00 : f32
    %52 = vector.broadcast %cst_10 : f32 to vector<4x8x128xf32>
    %53 = arith.subf %52, %51 : vector<4x8x128xf32>
    %54 = math.exp %53 : vector<4x8x128xf32>
    %cst_11 = arith.constant 1.000000e+00 : f32
    %55 = vector.broadcast %cst_11 : f32 to vector<4x8x128xf32>
    %56 = arith.addf %55, %54 : vector<4x8x128xf32>
    %cst_12 = arith.constant 1.000000e+00 : f32
    %57 = vector.broadcast %cst_12 : f32 to vector<4x8x128xf32>
    %58 = arith.divf %57, %56 : vector<4x8x128xf32>
    %59 = arith.mulf %51, %58 : vector<4x8x128xf32>
    %60 = vector.shape_cast %59 : vector<4x8x128xf32> to vector<32x128xf32>
    %c0_13 = arith.constant 0 : index
    %c0_14 = arith.constant 0 : index
    %61 = vector.load %arg4[%c0_13, %c0_14] : memref<128x256xf32, #tpu.memory_space<vmem>>, vector<128x256xf32>
    %cst_15 = arith.constant dense<0.000000e+00> : vector<32x256xf32>
    %62 = tpu.matmul %60, %61, %cst_15 {dimension_numbers = #tpu.dot_dimension_numbers<[1], [0], [0], [1], [0, 0, 1, 1], [], []>} : vector<32x128xf32>, vector<128x256xf32>, vector<32x256xf32> -> vector<32x256xf32>
    %63 = vector.extract_strided_slice %62 {offsets = [0, 0], sizes = [32, 128], strides = [1, 1]} : vector<32x256xf32> to vector<32x128xf32>
    %64 = vector.broadcast %4 : vector<1x128xf32> to vector<32x128xf32>
    %65 = arith.addf %63, %64 : vector<32x128xf32>
    %cst_16 = arith.constant 2.000000e+01 : f32
    %66 = vector.broadcast %cst_16 : f32 to vector<32x128xf32>
    %67 = arith.cmpf ogt, %65, %66 : vector<32x128xf32>
    %cst_17 = arith.constant 2.000000e+01 : f32
    %68 = vector.broadcast %cst_17 : f32 to vector<32x128xf32>
    %69 = arith.minimumf %65, %68 : vector<32x128xf32>
    %70 = math.exp %69 : vector<32x128xf32>
    %cst_18 = arith.constant 1.000000e+00 : f32
    %71 = vector.broadcast %cst_18 : f32 to vector<32x128xf32>
    %72 = arith.addf %71, %70 : vector<32x128xf32>
    %73 = math.log %72 : vector<32x128xf32>
    %74 = arith.select %67, %65, %73 : vector<32x128xi1>, vector<32x128xf32>
    %75 = vector.extract_strided_slice %62 {offsets = [0, 128], sizes = [32, 16], strides = [1, 1]} : vector<32x256xf32> to vector<32x16xf32>
    %76 = vector.extract_strided_slice %62 {offsets = [0, 144], sizes = [32, 16], strides = [1, 1]} : vector<32x256xf32> to vector<32x16xf32>
    %77 = vector.shape_cast %74 : vector<32x128xf32> to vector<4x8x128xf32>
    %78 = arith.mulf %77, %59 : vector<4x8x128xf32>
    %79 = vector.shape_cast %75 : vector<32x16xf32> to vector<4x8x16xf32>
    %80 = vector.shape_cast %76 : vector<32x16xf32> to vector<4x8x16xf32>
    %cst_19 = arith.constant 0.000000e+00 : f32
    %81 = vector.broadcast %cst_19 : f32 to vector<4x8x128xf32>
    %82 = vector.extract_strided_slice %77 {offsets = [0, 0, 0], sizes = [4, 1, 128], strides = [1, 1, 1]} : vector<4x8x128xf32> to vector<4x1x128xf32>
    %83 = vector.shape_cast %82 : vector<4x1x128xf32> to vector<4x128xf32>
    %84 = vector.shape_cast %83 : vector<4x128xf32> to vector<4x1x128xf32>
    %85 = vector.shape_cast %0 : vector<8x128xf32> to vector<1x8x128xf32>
    %86 = vector.broadcast %84 : vector<4x1x128xf32> to vector<4x8x128xf32>
    %87 = vector.broadcast %85 : vector<1x8x128xf32> to vector<4x8x128xf32>
    %88 = arith.mulf %86, %87 : vector<4x8x128xf32>
    %89 = math.exp %88 : vector<4x8x128xf32>
    %90 = vector.extract_strided_slice %79 {offsets = [0, 0, 0], sizes = [4, 1, 16], strides = [1, 1, 1]} : vector<4x8x16xf32> to vector<4x1x16xf32>
    %91 = vector.shape_cast %90 : vector<4x1x16xf32> to vector<4x16xf32>
    %92 = vector.extract_strided_slice %80 {offsets = [0, 0, 0], sizes = [4, 1, 16], strides = [1, 1, 1]} : vector<4x8x16xf32> to vector<4x1x16xf32>
    %93 = vector.shape_cast %92 : vector<4x1x16xf32> to vector<4x16xf32>
    %94 = vector.extract_strided_slice %91 {offsets = [0, 0], sizes = [4, 8], strides = [1, 1]} : vector<4x16xf32> to vector<4x8xf32>
    %95 = vector.shape_cast %94 : vector<4x8xf32> to vector<4x8x1xf32>
    %96 = vector.shape_cast %95 : vector<4x8x1xf32> to vector<4x8x1xf32>
    %97 = vector.broadcast %96 : vector<4x8x1xf32> to vector<4x8x64xf32>
    %98 = vector.extract_strided_slice %91 {offsets = [0, 8], sizes = [4, 8], strides = [1, 1]} : vector<4x16xf32> to vector<4x8xf32>
    %99 = vector.shape_cast %98 : vector<4x8xf32> to vector<4x8x1xf32>
    %100 = vector.shape_cast %99 : vector<4x8x1xf32> to vector<4x8x1xf32>
    %101 = vector.broadcast %100 : vector<4x8x1xf32> to vector<4x8x64xf32>
    %102 = tpu.concatenate %97, %101 in 2 : vector<4x8x64xf32>, vector<4x8x64xf32> -> vector<4x8x128xf32>
    %103 = vector.extract_strided_slice %93 {offsets = [0, 0], sizes = [4, 8], strides = [1, 1]} : vector<4x16xf32> to vector<4x8xf32>
    %104 = vector.shape_cast %103 : vector<4x8xf32> to vector<4x8x1xf32>
    %105 = vector.shape_cast %104 : vector<4x8x1xf32> to vector<4x8x1xf32>
    %106 = vector.broadcast %105 : vector<4x8x1xf32> to vector<4x8x64xf32>
    %107 = vector.extract_strided_slice %93 {offsets = [0, 8], sizes = [4, 8], strides = [1, 1]} : vector<4x16xf32> to vector<4x8xf32>
    %108 = vector.shape_cast %107 : vector<4x8xf32> to vector<4x8x1xf32>
    %109 = vector.shape_cast %108 : vector<4x8x1xf32> to vector<4x8x1xf32>
    %110 = vector.broadcast %109 : vector<4x8x1xf32> to vector<4x8x64xf32>
    %111 = tpu.concatenate %106, %110 in 2 : vector<4x8x64xf32>, vector<4x8x64xf32> -> vector<4x8x128xf32>
    %112 = arith.mulf %89, %81 : vector<4x8x128xf32>
    %113 = vector.extract_strided_slice %78 {offsets = [0, 0, 0], sizes = [4, 1, 128], strides = [1, 1, 1]} : vector<4x8x128xf32> to vector<4x1x128xf32>
    %114 = vector.shape_cast %113 : vector<4x1x128xf32> to vector<4x128xf32>
    %115 = vector.shape_cast %114 : vector<4x128xf32> to vector<4x1x128xf32>
    %116 = vector.broadcast %115 : vector<4x1x128xf32> to vector<4x8x128xf32>
    %117 = arith.mulf %102, %116 : vector<4x8x128xf32>
    %118 = arith.addf %112, %117 : vector<4x8x128xf32>
    %119 = arith.mulf %118, %111 : vector<4x8x128xf32>
    %cst_20 = arith.constant dense<0.000000e+00> : vector<4x128xf32>
    %120 = vector.multi_reduction <add>, %119, %cst_20 [1] : vector<4x8x128xf32> to vector<4x128xf32>
    %121 = vector.extract_strided_slice %77 {offsets = [0, 1, 0], sizes = [4, 1, 128], strides = [1, 1, 1]} : vector<4x8x128xf32> to vector<4x1x128xf32>
    %122 = vector.shape_cast %121 : vector<4x1x128xf32> to vector<4x128xf32>
    %123 = vector.shape_cast %122 : vector<4x128xf32> to vector<4x1x128xf32>
    %124 = vector.shape_cast %0 : vector<8x128xf32> to vector<1x8x128xf32>
    %125 = vector.broadcast %123 : vector<4x1x128xf32> to vector<4x8x128xf32>
    %126 = vector.broadcast %124 : vector<1x8x128xf32> to vector<4x8x128xf32>
    %127 = arith.mulf %125, %126 : vector<4x8x128xf32>
    %128 = math.exp %127 : vector<4x8x128xf32>
    %129 = vector.extract_strided_slice %79 {offsets = [0, 1, 0], sizes = [4, 1, 16], strides = [1, 1, 1]} : vector<4x8x16xf32> to vector<4x1x16xf32>
    %130 = vector.shape_cast %129 : vector<4x1x16xf32> to vector<4x16xf32>
    %131 = vector.extract_strided_slice %80 {offsets = [0, 1, 0], sizes = [4, 1, 16], strides = [1, 1, 1]} : vector<4x8x16xf32> to vector<4x1x16xf32>
    %132 = vector.shape_cast %131 : vector<4x1x16xf32> to vector<4x16xf32>
    %133 = vector.extract_strided_slice %130 {offsets = [0, 0], sizes = [4, 8], strides = [1, 1]} : vector<4x16xf32> to vector<4x8xf32>
    %134 = vector.shape_cast %133 : vector<4x8xf32> to vector<4x8x1xf32>
    %135 = vector.shape_cast %134 : vector<4x8x1xf32> to vector<4x8x1xf32>
    %136 = vector.broadcast %135 : vector<4x8x1xf32> to vector<4x8x64xf32>
    %137 = vector.extract_strided_slice %130 {offsets = [0, 8], sizes = [4, 8], strides = [1, 1]} : vector<4x16xf32> to vector<4x8xf32>
    %138 = vector.shape_cast %137 : vector<4x8xf32> to vector<4x8x1xf32>
    %139 = vector.shape_cast %138 : vector<4x8x1xf32> to vector<4x8x1xf32>
    %140 = vector.broadcast %139 : vector<4x8x1xf32> to vector<4x8x64xf32>
    %141 = tpu.concatenate %136, %140 in 2 : vector<4x8x64xf32>, vector<4x8x64xf32> -> vector<4x8x128xf32>
    %142 = vector.extract_strided_slice %132 {offsets = [0, 0], sizes = [4, 8], strides = [1, 1]} : vector<4x16xf32> to vector<4x8xf32>
    %143 = vector.shape_cast %142 : vector<4x8xf32> to vector<4x8x1xf32>
    %144 = vector.shape_cast %143 : vector<4x8x1xf32> to vector<4x8x1xf32>
    %145 = vector.broadcast %144 : vector<4x8x1xf32> to vector<4x8x64xf32>
    %146 = vector.extract_strided_slice %132 {offsets = [0, 8], sizes = [4, 8], strides = [1, 1]} : vector<4x16xf32> to vector<4x8xf32>
    %147 = vector.shape_cast %146 : vector<4x8xf32> to vector<4x8x1xf32>
    %148 = vector.shape_cast %147 : vector<4x8x1xf32> to vector<4x8x1xf32>
    %149 = vector.broadcast %148 : vector<4x8x1xf32> to vector<4x8x64xf32>
    %150 = tpu.concatenate %145, %149 in 2 : vector<4x8x64xf32>, vector<4x8x64xf32> -> vector<4x8x128xf32>
    %151 = arith.mulf %128, %118 : vector<4x8x128xf32>
    %152 = vector.extract_strided_slice %78 {offsets = [0, 1, 0], sizes = [4, 1, 128], strides = [1, 1, 1]} : vector<4x8x128xf32> to vector<4x1x128xf32>
    %153 = vector.shape_cast %152 : vector<4x1x128xf32> to vector<4x128xf32>
    %154 = vector.shape_cast %153 : vector<4x128xf32> to vector<4x1x128xf32>
    %155 = vector.broadcast %154 : vector<4x1x128xf32> to vector<4x8x128xf32>
    %156 = arith.mulf %141, %155 : vector<4x8x128xf32>
    %157 = arith.addf %151, %156 : vector<4x8x128xf32>
    %158 = arith.mulf %157, %150 : vector<4x8x128xf32>
    %cst_21 = arith.constant dense<0.000000e+00> : vector<4x128xf32>
    %159 = vector.multi_reduction <add>, %158, %cst_21 [1] : vector<4x8x128xf32> to vector<4x128xf32>
    %160 = vector.extract_strided_slice %77 {offsets = [0, 2, 0], sizes = [4, 1, 128], strides = [1, 1, 1]} : vector<4x8x128xf32> to vector<4x1x128xf32>
    %161 = vector.shape_cast %160 : vector<4x1x128xf32> to vector<4x128xf32>
    %162 = vector.shape_cast %161 : vector<4x128xf32> to vector<4x1x128xf32>
    %163 = vector.shape_cast %0 : vector<8x128xf32> to vector<1x8x128xf32>
    %164 = vector.broadcast %162 : vector<4x1x128xf32> to vector<4x8x128xf32>
    %165 = vector.broadcast %163 : vector<1x8x128xf32> to vector<4x8x128xf32>
    %166 = arith.mulf %164, %165 : vector<4x8x128xf32>
    %167 = math.exp %166 : vector<4x8x128xf32>
    %168 = vector.extract_strided_slice %79 {offsets = [0, 2, 0], sizes = [4, 1, 16], strides = [1, 1, 1]} : vector<4x8x16xf32> to vector<4x1x16xf32>
    %169 = vector.shape_cast %168 : vector<4x1x16xf32> to vector<4x16xf32>
    %170 = vector.extract_strided_slice %80 {offsets = [0, 2, 0], sizes = [4, 1, 16], strides = [1, 1, 1]} : vector<4x8x16xf32> to vector<4x1x16xf32>
    %171 = vector.shape_cast %170 : vector<4x1x16xf32> to vector<4x16xf32>
    %172 = vector.extract_strided_slice %169 {offsets = [0, 0], sizes = [4, 8], strides = [1, 1]} : vector<4x16xf32> to vector<4x8xf32>
    %173 = vector.shape_cast %172 : vector<4x8xf32> to vector<4x8x1xf32>
    %174 = vector.shape_cast %173 : vector<4x8x1xf32> to vector<4x8x1xf32>
    %175 = vector.broadcast %174 : vector<4x8x1xf32> to vector<4x8x64xf32>
    %176 = vector.extract_strided_slice %169 {offsets = [0, 8], sizes = [4, 8], strides = [1, 1]} : vector<4x16xf32> to vector<4x8xf32>
    %177 = vector.shape_cast %176 : vector<4x8xf32> to vector<4x8x1xf32>
    %178 = vector.shape_cast %177 : vector<4x8x1xf32> to vector<4x8x1xf32>
    %179 = vector.broadcast %178 : vector<4x8x1xf32> to vector<4x8x64xf32>
    %180 = tpu.concatenate %175, %179 in 2 : vector<4x8x64xf32>, vector<4x8x64xf32> -> vector<4x8x128xf32>
    %181 = vector.extract_strided_slice %171 {offsets = [0, 0], sizes = [4, 8], strides = [1, 1]} : vector<4x16xf32> to vector<4x8xf32>
    %182 = vector.shape_cast %181 : vector<4x8xf32> to vector<4x8x1xf32>
    %183 = vector.shape_cast %182 : vector<4x8x1xf32> to vector<4x8x1xf32>
    %184 = vector.broadcast %183 : vector<4x8x1xf32> to vector<4x8x64xf32>
    %185 = vector.extract_strided_slice %171 {offsets = [0, 8], sizes = [4, 8], strides = [1, 1]} : vector<4x16xf32> to vector<4x8xf32>
    %186 = vector.shape_cast %185 : vector<4x8xf32> to vector<4x8x1xf32>
    %187 = vector.shape_cast %186 : vector<4x8x1xf32> to vector<4x8x1xf32>
    %188 = vector.broadcast %187 : vector<4x8x1xf32> to vector<4x8x64xf32>
    %189 = tpu.concatenate %184, %188 in 2 : vector<4x8x64xf32>, vector<4x8x64xf32> -> vector<4x8x128xf32>
    %190 = arith.mulf %167, %157 : vector<4x8x128xf32>
    %191 = vector.extract_strided_slice %78 {offsets = [0, 2, 0], sizes = [4, 1, 128], strides = [1, 1, 1]} : vector<4x8x128xf32> to vector<4x1x128xf32>
    %192 = vector.shape_cast %191 : vector<4x1x128xf32> to vector<4x128xf32>
    %193 = vector.shape_cast %192 : vector<4x128xf32> to vector<4x1x128xf32>
    %194 = vector.broadcast %193 : vector<4x1x128xf32> to vector<4x8x128xf32>
    %195 = arith.mulf %180, %194 : vector<4x8x128xf32>
    %196 = arith.addf %190, %195 : vector<4x8x128xf32>
    %197 = arith.mulf %196, %189 : vector<4x8x128xf32>
    %cst_22 = arith.constant dense<0.000000e+00> : vector<4x128xf32>
    %198 = vector.multi_reduction <add>, %197, %cst_22 [1] : vector<4x8x128xf32> to vector<4x128xf32>
    %199 = vector.extract_strided_slice %77 {offsets = [0, 3, 0], sizes = [4, 1, 128], strides = [1, 1, 1]} : vector<4x8x128xf32> to vector<4x1x128xf32>
    %200 = vector.shape_cast %199 : vector<4x1x128xf32> to vector<4x128xf32>
    %201 = vector.shape_cast %200 : vector<4x128xf32> to vector<4x1x128xf32>
    %202 = vector.shape_cast %0 : vector<8x128xf32> to vector<1x8x128xf32>
    %203 = vector.broadcast %201 : vector<4x1x128xf32> to vector<4x8x128xf32>
    %204 = vector.broadcast %202 : vector<1x8x128xf32> to vector<4x8x128xf32>
    %205 = arith.mulf %203, %204 : vector<4x8x128xf32>
    %206 = math.exp %205 : vector<4x8x128xf32>
    %207 = vector.extract_strided_slice %79 {offsets = [0, 3, 0], sizes = [4, 1, 16], strides = [1, 1, 1]} : vector<4x8x16xf32> to vector<4x1x16xf32>
    %208 = vector.shape_cast %207 : vector<4x1x16xf32> to vector<4x16xf32>
    %209 = vector.extract_strided_slice %80 {offsets = [0, 3, 0], sizes = [4, 1, 16], strides = [1, 1, 1]} : vector<4x8x16xf32> to vector<4x1x16xf32>
    %210 = vector.shape_cast %209 : vector<4x1x16xf32> to vector<4x16xf32>
    %211 = vector.extract_strided_slice %208 {offsets = [0, 0], sizes = [4, 8], strides = [1, 1]} : vector<4x16xf32> to vector<4x8xf32>
    %212 = vector.shape_cast %211 : vector<4x8xf32> to vector<4x8x1xf32>
    %213 = vector.shape_cast %212 : vector<4x8x1xf32> to vector<4x8x1xf32>
    %214 = vector.broadcast %213 : vector<4x8x1xf32> to vector<4x8x64xf32>
    %215 = vector.extract_strided_slice %208 {offsets = [0, 8], sizes = [4, 8], strides = [1, 1]} : vector<4x16xf32> to vector<4x8xf32>
    %216 = vector.shape_cast %215 : vector<4x8xf32> to vector<4x8x1xf32>
    %217 = vector.shape_cast %216 : vector<4x8x1xf32> to vector<4x8x1xf32>
    %218 = vector.broadcast %217 : vector<4x8x1xf32> to vector<4x8x64xf32>
    %219 = tpu.concatenate %214, %218 in 2 : vector<4x8x64xf32>, vector<4x8x64xf32> -> vector<4x8x128xf32>
    %220 = vector.extract_strided_slice %210 {offsets = [0, 0], sizes = [4, 8], strides = [1, 1]} : vector<4x16xf32> to vector<4x8xf32>
    %221 = vector.shape_cast %220 : vector<4x8xf32> to vector<4x8x1xf32>
    %222 = vector.shape_cast %221 : vector<4x8x1xf32> to vector<4x8x1xf32>
    %223 = vector.broadcast %222 : vector<4x8x1xf32> to vector<4x8x64xf32>
    %224 = vector.extract_strided_slice %210 {offsets = [0, 8], sizes = [4, 8], strides = [1, 1]} : vector<4x16xf32> to vector<4x8xf32>
    %225 = vector.shape_cast %224 : vector<4x8xf32> to vector<4x8x1xf32>
    %226 = vector.shape_cast %225 : vector<4x8x1xf32> to vector<4x8x1xf32>
    %227 = vector.broadcast %226 : vector<4x8x1xf32> to vector<4x8x64xf32>
    %228 = tpu.concatenate %223, %227 in 2 : vector<4x8x64xf32>, vector<4x8x64xf32> -> vector<4x8x128xf32>
    %229 = arith.mulf %206, %196 : vector<4x8x128xf32>
    %230 = vector.extract_strided_slice %78 {offsets = [0, 3, 0], sizes = [4, 1, 128], strides = [1, 1, 1]} : vector<4x8x128xf32> to vector<4x1x128xf32>
    %231 = vector.shape_cast %230 : vector<4x1x128xf32> to vector<4x128xf32>
    %232 = vector.shape_cast %231 : vector<4x128xf32> to vector<4x1x128xf32>
    %233 = vector.broadcast %232 : vector<4x1x128xf32> to vector<4x8x128xf32>
    %234 = arith.mulf %219, %233 : vector<4x8x128xf32>
    %235 = arith.addf %229, %234 : vector<4x8x128xf32>
    %236 = arith.mulf %235, %228 : vector<4x8x128xf32>
    %cst_23 = arith.constant dense<0.000000e+00> : vector<4x128xf32>
    %237 = vector.multi_reduction <add>, %236, %cst_23 [1] : vector<4x8x128xf32> to vector<4x128xf32>
    %238 = vector.extract_strided_slice %77 {offsets = [0, 4, 0], sizes = [4, 1, 128], strides = [1, 1, 1]} : vector<4x8x128xf32> to vector<4x1x128xf32>
    %239 = vector.shape_cast %238 : vector<4x1x128xf32> to vector<4x128xf32>
    %240 = vector.shape_cast %239 : vector<4x128xf32> to vector<4x1x128xf32>
    %241 = vector.shape_cast %0 : vector<8x128xf32> to vector<1x8x128xf32>
    %242 = vector.broadcast %240 : vector<4x1x128xf32> to vector<4x8x128xf32>
    %243 = vector.broadcast %241 : vector<1x8x128xf32> to vector<4x8x128xf32>
    %244 = arith.mulf %242, %243 : vector<4x8x128xf32>
    %245 = math.exp %244 : vector<4x8x128xf32>
    %246 = vector.extract_strided_slice %79 {offsets = [0, 4, 0], sizes = [4, 1, 16], strides = [1, 1, 1]} : vector<4x8x16xf32> to vector<4x1x16xf32>
    %247 = vector.shape_cast %246 : vector<4x1x16xf32> to vector<4x16xf32>
    %248 = vector.extract_strided_slice %80 {offsets = [0, 4, 0], sizes = [4, 1, 16], strides = [1, 1, 1]} : vector<4x8x16xf32> to vector<4x1x16xf32>
    %249 = vector.shape_cast %248 : vector<4x1x16xf32> to vector<4x16xf32>
    %250 = vector.extract_strided_slice %247 {offsets = [0, 0], sizes = [4, 8], strides = [1, 1]} : vector<4x16xf32> to vector<4x8xf32>
    %251 = vector.shape_cast %250 : vector<4x8xf32> to vector<4x8x1xf32>
    %252 = vector.shape_cast %251 : vector<4x8x1xf32> to vector<4x8x1xf32>
    %253 = vector.broadcast %252 : vector<4x8x1xf32> to vector<4x8x64xf32>
    %254 = vector.extract_strided_slice %247 {offsets = [0, 8], sizes = [4, 8], strides = [1, 1]} : vector<4x16xf32> to vector<4x8xf32>
    %255 = vector.shape_cast %254 : vector<4x8xf32> to vector<4x8x1xf32>
    %256 = vector.shape_cast %255 : vector<4x8x1xf32> to vector<4x8x1xf32>
    %257 = vector.broadcast %256 : vector<4x8x1xf32> to vector<4x8x64xf32>
    %258 = tpu.concatenate %253, %257 in 2 : vector<4x8x64xf32>, vector<4x8x64xf32> -> vector<4x8x128xf32>
    %259 = vector.extract_strided_slice %249 {offsets = [0, 0], sizes = [4, 8], strides = [1, 1]} : vector<4x16xf32> to vector<4x8xf32>
    %260 = vector.shape_cast %259 : vector<4x8xf32> to vector<4x8x1xf32>
    %261 = vector.shape_cast %260 : vector<4x8x1xf32> to vector<4x8x1xf32>
    %262 = vector.broadcast %261 : vector<4x8x1xf32> to vector<4x8x64xf32>
    %263 = vector.extract_strided_slice %249 {offsets = [0, 8], sizes = [4, 8], strides = [1, 1]} : vector<4x16xf32> to vector<4x8xf32>
    %264 = vector.shape_cast %263 : vector<4x8xf32> to vector<4x8x1xf32>
    %265 = vector.shape_cast %264 : vector<4x8x1xf32> to vector<4x8x1xf32>
    %266 = vector.broadcast %265 : vector<4x8x1xf32> to vector<4x8x64xf32>
    %267 = tpu.concatenate %262, %266 in 2 : vector<4x8x64xf32>, vector<4x8x64xf32> -> vector<4x8x128xf32>
    %268 = arith.mulf %245, %235 : vector<4x8x128xf32>
    %269 = vector.extract_strided_slice %78 {offsets = [0, 4, 0], sizes = [4, 1, 128], strides = [1, 1, 1]} : vector<4x8x128xf32> to vector<4x1x128xf32>
    %270 = vector.shape_cast %269 : vector<4x1x128xf32> to vector<4x128xf32>
    %271 = vector.shape_cast %270 : vector<4x128xf32> to vector<4x1x128xf32>
    %272 = vector.broadcast %271 : vector<4x1x128xf32> to vector<4x8x128xf32>
    %273 = arith.mulf %258, %272 : vector<4x8x128xf32>
    %274 = arith.addf %268, %273 : vector<4x8x128xf32>
    %275 = arith.mulf %274, %267 : vector<4x8x128xf32>
    %cst_24 = arith.constant dense<0.000000e+00> : vector<4x128xf32>
    %276 = vector.multi_reduction <add>, %275, %cst_24 [1] : vector<4x8x128xf32> to vector<4x128xf32>
    %277 = vector.extract_strided_slice %77 {offsets = [0, 5, 0], sizes = [4, 1, 128], strides = [1, 1, 1]} : vector<4x8x128xf32> to vector<4x1x128xf32>
    %278 = vector.shape_cast %277 : vector<4x1x128xf32> to vector<4x128xf32>
    %279 = vector.shape_cast %278 : vector<4x128xf32> to vector<4x1x128xf32>
    %280 = vector.shape_cast %0 : vector<8x128xf32> to vector<1x8x128xf32>
    %281 = vector.broadcast %279 : vector<4x1x128xf32> to vector<4x8x128xf32>
    %282 = vector.broadcast %280 : vector<1x8x128xf32> to vector<4x8x128xf32>
    %283 = arith.mulf %281, %282 : vector<4x8x128xf32>
    %284 = math.exp %283 : vector<4x8x128xf32>
    %285 = vector.extract_strided_slice %79 {offsets = [0, 5, 0], sizes = [4, 1, 16], strides = [1, 1, 1]} : vector<4x8x16xf32> to vector<4x1x16xf32>
    %286 = vector.shape_cast %285 : vector<4x1x16xf32> to vector<4x16xf32>
    %287 = vector.extract_strided_slice %80 {offsets = [0, 5, 0], sizes = [4, 1, 16], strides = [1, 1, 1]} : vector<4x8x16xf32> to vector<4x1x16xf32>
    %288 = vector.shape_cast %287 : vector<4x1x16xf32> to vector<4x16xf32>
    %289 = vector.extract_strided_slice %286 {offsets = [0, 0], sizes = [4, 8], strides = [1, 1]} : vector<4x16xf32> to vector<4x8xf32>
    %290 = vector.shape_cast %289 : vector<4x8xf32> to vector<4x8x1xf32>
    %291 = vector.shape_cast %290 : vector<4x8x1xf32> to vector<4x8x1xf32>
    %292 = vector.broadcast %291 : vector<4x8x1xf32> to vector<4x8x64xf32>
    %293 = vector.extract_strided_slice %286 {offsets = [0, 8], sizes = [4, 8], strides = [1, 1]} : vector<4x16xf32> to vector<4x8xf32>
    %294 = vector.shape_cast %293 : vector<4x8xf32> to vector<4x8x1xf32>
    %295 = vector.shape_cast %294 : vector<4x8x1xf32> to vector<4x8x1xf32>
    %296 = vector.broadcast %295 : vector<4x8x1xf32> to vector<4x8x64xf32>
    %297 = tpu.concatenate %292, %296 in 2 : vector<4x8x64xf32>, vector<4x8x64xf32> -> vector<4x8x128xf32>
    %298 = vector.extract_strided_slice %288 {offsets = [0, 0], sizes = [4, 8], strides = [1, 1]} : vector<4x16xf32> to vector<4x8xf32>
    %299 = vector.shape_cast %298 : vector<4x8xf32> to vector<4x8x1xf32>
    %300 = vector.shape_cast %299 : vector<4x8x1xf32> to vector<4x8x1xf32>
    %301 = vector.broadcast %300 : vector<4x8x1xf32> to vector<4x8x64xf32>
    %302 = vector.extract_strided_slice %288 {offsets = [0, 8], sizes = [4, 8], strides = [1, 1]} : vector<4x16xf32> to vector<4x8xf32>
    %303 = vector.shape_cast %302 : vector<4x8xf32> to vector<4x8x1xf32>
    %304 = vector.shape_cast %303 : vector<4x8x1xf32> to vector<4x8x1xf32>
    %305 = vector.broadcast %304 : vector<4x8x1xf32> to vector<4x8x64xf32>
    %306 = tpu.concatenate %301, %305 in 2 : vector<4x8x64xf32>, vector<4x8x64xf32> -> vector<4x8x128xf32>
    %307 = arith.mulf %284, %274 : vector<4x8x128xf32>
    %308 = vector.extract_strided_slice %78 {offsets = [0, 5, 0], sizes = [4, 1, 128], strides = [1, 1, 1]} : vector<4x8x128xf32> to vector<4x1x128xf32>
    %309 = vector.shape_cast %308 : vector<4x1x128xf32> to vector<4x128xf32>
    %310 = vector.shape_cast %309 : vector<4x128xf32> to vector<4x1x128xf32>
    %311 = vector.broadcast %310 : vector<4x1x128xf32> to vector<4x8x128xf32>
    %312 = arith.mulf %297, %311 : vector<4x8x128xf32>
    %313 = arith.addf %307, %312 : vector<4x8x128xf32>
    %314 = arith.mulf %313, %306 : vector<4x8x128xf32>
    %cst_25 = arith.constant dense<0.000000e+00> : vector<4x128xf32>
    %315 = vector.multi_reduction <add>, %314, %cst_25 [1] : vector<4x8x128xf32> to vector<4x128xf32>
    %316 = vector.extract_strided_slice %77 {offsets = [0, 6, 0], sizes = [4, 1, 128], strides = [1, 1, 1]} : vector<4x8x128xf32> to vector<4x1x128xf32>
    %317 = vector.shape_cast %316 : vector<4x1x128xf32> to vector<4x128xf32>
    %318 = vector.shape_cast %317 : vector<4x128xf32> to vector<4x1x128xf32>
    %319 = vector.shape_cast %0 : vector<8x128xf32> to vector<1x8x128xf32>
    %320 = vector.broadcast %318 : vector<4x1x128xf32> to vector<4x8x128xf32>
    %321 = vector.broadcast %319 : vector<1x8x128xf32> to vector<4x8x128xf32>
    %322 = arith.mulf %320, %321 : vector<4x8x128xf32>
    %323 = math.exp %322 : vector<4x8x128xf32>
    %324 = vector.extract_strided_slice %79 {offsets = [0, 6, 0], sizes = [4, 1, 16], strides = [1, 1, 1]} : vector<4x8x16xf32> to vector<4x1x16xf32>
    %325 = vector.shape_cast %324 : vector<4x1x16xf32> to vector<4x16xf32>
    %326 = vector.extract_strided_slice %80 {offsets = [0, 6, 0], sizes = [4, 1, 16], strides = [1, 1, 1]} : vector<4x8x16xf32> to vector<4x1x16xf32>
    %327 = vector.shape_cast %326 : vector<4x1x16xf32> to vector<4x16xf32>
    %328 = vector.extract_strided_slice %325 {offsets = [0, 0], sizes = [4, 8], strides = [1, 1]} : vector<4x16xf32> to vector<4x8xf32>
    %329 = vector.shape_cast %328 : vector<4x8xf32> to vector<4x8x1xf32>
    %330 = vector.shape_cast %329 : vector<4x8x1xf32> to vector<4x8x1xf32>
    %331 = vector.broadcast %330 : vector<4x8x1xf32> to vector<4x8x64xf32>
    %332 = vector.extract_strided_slice %325 {offsets = [0, 8], sizes = [4, 8], strides = [1, 1]} : vector<4x16xf32> to vector<4x8xf32>
    %333 = vector.shape_cast %332 : vector<4x8xf32> to vector<4x8x1xf32>
    %334 = vector.shape_cast %333 : vector<4x8x1xf32> to vector<4x8x1xf32>
    %335 = vector.broadcast %334 : vector<4x8x1xf32> to vector<4x8x64xf32>
    %336 = tpu.concatenate %331, %335 in 2 : vector<4x8x64xf32>, vector<4x8x64xf32> -> vector<4x8x128xf32>
    %337 = vector.extract_strided_slice %327 {offsets = [0, 0], sizes = [4, 8], strides = [1, 1]} : vector<4x16xf32> to vector<4x8xf32>
    %338 = vector.shape_cast %337 : vector<4x8xf32> to vector<4x8x1xf32>
    %339 = vector.shape_cast %338 : vector<4x8x1xf32> to vector<4x8x1xf32>
    %340 = vector.broadcast %339 : vector<4x8x1xf32> to vector<4x8x64xf32>
    %341 = vector.extract_strided_slice %327 {offsets = [0, 8], sizes = [4, 8], strides = [1, 1]} : vector<4x16xf32> to vector<4x8xf32>
    %342 = vector.shape_cast %341 : vector<4x8xf32> to vector<4x8x1xf32>
    %343 = vector.shape_cast %342 : vector<4x8x1xf32> to vector<4x8x1xf32>
    %344 = vector.broadcast %343 : vector<4x8x1xf32> to vector<4x8x64xf32>
    %345 = tpu.concatenate %340, %344 in 2 : vector<4x8x64xf32>, vector<4x8x64xf32> -> vector<4x8x128xf32>
    %346 = arith.mulf %323, %313 : vector<4x8x128xf32>
    %347 = vector.extract_strided_slice %78 {offsets = [0, 6, 0], sizes = [4, 1, 128], strides = [1, 1, 1]} : vector<4x8x128xf32> to vector<4x1x128xf32>
    %348 = vector.shape_cast %347 : vector<4x1x128xf32> to vector<4x128xf32>
    %349 = vector.shape_cast %348 : vector<4x128xf32> to vector<4x1x128xf32>
    %350 = vector.broadcast %349 : vector<4x1x128xf32> to vector<4x8x128xf32>
    %351 = arith.mulf %336, %350 : vector<4x8x128xf32>
    %352 = arith.addf %346, %351 : vector<4x8x128xf32>
    %353 = arith.mulf %352, %345 : vector<4x8x128xf32>
    %cst_26 = arith.constant dense<0.000000e+00> : vector<4x128xf32>
    %354 = vector.multi_reduction <add>, %353, %cst_26 [1] : vector<4x8x128xf32> to vector<4x128xf32>
    %355 = vector.extract_strided_slice %77 {offsets = [0, 7, 0], sizes = [4, 1, 128], strides = [1, 1, 1]} : vector<4x8x128xf32> to vector<4x1x128xf32>
    %356 = vector.shape_cast %355 : vector<4x1x128xf32> to vector<4x128xf32>
    %357 = vector.shape_cast %356 : vector<4x128xf32> to vector<4x1x128xf32>
    %358 = vector.shape_cast %0 : vector<8x128xf32> to vector<1x8x128xf32>
    %359 = vector.broadcast %357 : vector<4x1x128xf32> to vector<4x8x128xf32>
    %360 = vector.broadcast %358 : vector<1x8x128xf32> to vector<4x8x128xf32>
    %361 = arith.mulf %359, %360 : vector<4x8x128xf32>
    %362 = math.exp %361 : vector<4x8x128xf32>
    %363 = vector.extract_strided_slice %79 {offsets = [0, 7, 0], sizes = [4, 1, 16], strides = [1, 1, 1]} : vector<4x8x16xf32> to vector<4x1x16xf32>
    %364 = vector.shape_cast %363 : vector<4x1x16xf32> to vector<4x16xf32>
    %365 = vector.extract_strided_slice %80 {offsets = [0, 7, 0], sizes = [4, 1, 16], strides = [1, 1, 1]} : vector<4x8x16xf32> to vector<4x1x16xf32>
    %366 = vector.shape_cast %365 : vector<4x1x16xf32> to vector<4x16xf32>
    %367 = vector.extract_strided_slice %364 {offsets = [0, 0], sizes = [4, 8], strides = [1, 1]} : vector<4x16xf32> to vector<4x8xf32>
    %368 = vector.shape_cast %367 : vector<4x8xf32> to vector<4x8x1xf32>
    %369 = vector.shape_cast %368 : vector<4x8x1xf32> to vector<4x8x1xf32>
    %370 = vector.broadcast %369 : vector<4x8x1xf32> to vector<4x8x64xf32>
    %371 = vector.extract_strided_slice %364 {offsets = [0, 8], sizes = [4, 8], strides = [1, 1]} : vector<4x16xf32> to vector<4x8xf32>
    %372 = vector.shape_cast %371 : vector<4x8xf32> to vector<4x8x1xf32>
    %373 = vector.shape_cast %372 : vector<4x8x1xf32> to vector<4x8x1xf32>
    %374 = vector.broadcast %373 : vector<4x8x1xf32> to vector<4x8x64xf32>
    %375 = tpu.concatenate %370, %374 in 2 : vector<4x8x64xf32>, vector<4x8x64xf32> -> vector<4x8x128xf32>
    %376 = vector.extract_strided_slice %366 {offsets = [0, 0], sizes = [4, 8], strides = [1, 1]} : vector<4x16xf32> to vector<4x8xf32>
    %377 = vector.shape_cast %376 : vector<4x8xf32> to vector<4x8x1xf32>
    %378 = vector.shape_cast %377 : vector<4x8x1xf32> to vector<4x8x1xf32>
    %379 = vector.broadcast %378 : vector<4x8x1xf32> to vector<4x8x64xf32>
    %380 = vector.extract_strided_slice %366 {offsets = [0, 8], sizes = [4, 8], strides = [1, 1]} : vector<4x16xf32> to vector<4x8xf32>
    %381 = vector.shape_cast %380 : vector<4x8xf32> to vector<4x8x1xf32>
    %382 = vector.shape_cast %381 : vector<4x8x1xf32> to vector<4x8x1xf32>
    %383 = vector.broadcast %382 : vector<4x8x1xf32> to vector<4x8x64xf32>
    %384 = tpu.concatenate %379, %383 in 2 : vector<4x8x64xf32>, vector<4x8x64xf32> -> vector<4x8x128xf32>
    %385 = arith.mulf %362, %352 : vector<4x8x128xf32>
    %386 = vector.extract_strided_slice %78 {offsets = [0, 7, 0], sizes = [4, 1, 128], strides = [1, 1, 1]} : vector<4x8x128xf32> to vector<4x1x128xf32>
    %387 = vector.shape_cast %386 : vector<4x1x128xf32> to vector<4x128xf32>
    %388 = vector.shape_cast %387 : vector<4x128xf32> to vector<4x1x128xf32>
    %389 = vector.broadcast %388 : vector<4x1x128xf32> to vector<4x8x128xf32>
    %390 = arith.mulf %375, %389 : vector<4x8x128xf32>
    %391 = arith.addf %385, %390 : vector<4x8x128xf32>
    %392 = arith.mulf %391, %384 : vector<4x8x128xf32>
    %cst_27 = arith.constant dense<0.000000e+00> : vector<4x128xf32>
    %393 = vector.multi_reduction <add>, %392, %cst_27 [1] : vector<4x8x128xf32> to vector<4x128xf32>
    %394 = vector.shape_cast %120 : vector<4x128xf32> to vector<4x1x128xf32>
    %395 = vector.shape_cast %159 : vector<4x128xf32> to vector<4x1x128xf32>
    %396 = vector.shape_cast %198 : vector<4x128xf32> to vector<4x1x128xf32>
    %397 = vector.shape_cast %237 : vector<4x128xf32> to vector<4x1x128xf32>
    %398 = vector.shape_cast %276 : vector<4x128xf32> to vector<4x1x128xf32>
    %399 = vector.shape_cast %315 : vector<4x128xf32> to vector<4x1x128xf32>
    %400 = vector.shape_cast %354 : vector<4x128xf32> to vector<4x1x128xf32>
    %401 = vector.shape_cast %393 : vector<4x128xf32> to vector<4x1x128xf32>
    %402 = tpu.concatenate %394, %395, %396, %397, %398, %399, %400, %401 in 1 : vector<4x1x128xf32>, vector<4x1x128xf32>, vector<4x1x128xf32>, vector<4x1x128xf32>, vector<4x1x128xf32>, vector<4x1x128xf32>, vector<4x1x128xf32>, vector<4x1x128xf32> -> vector<4x8x128xf32>
    %403 = vector.shape_cast %5 : vector<1x128xf32> to vector<1x1x128xf32>
    %404 = vector.broadcast %403 : vector<1x1x128xf32> to vector<4x8x128xf32>
    %405 = arith.mulf %404, %59 : vector<4x8x128xf32>
    %406 = arith.addf %402, %405 : vector<4x8x128xf32>
    %407 = vector.extract_strided_slice %406 {offsets = [0, 0, 0], sizes = [4, 8, 64], strides = [1, 1, 1]} : vector<4x8x128xf32> to vector<4x8x64xf32>
    %408 = vector.extract_strided_slice %406 {offsets = [0, 0, 64], sizes = [4, 8, 64], strides = [1, 1, 1]} : vector<4x8x128xf32> to vector<4x8x64xf32>
    %409 = vector.extract_strided_slice %408 {offsets = [0, 7, 0], sizes = [4, 1, 64], strides = [1, 1, 1]} : vector<4x8x64xf32> to vector<4x1x64xf32>
    %410 = vector.extract_strided_slice %408 {offsets = [0, 6, 0], sizes = [4, 1, 64], strides = [1, 1, 1]} : vector<4x8x64xf32> to vector<4x1x64xf32>
    %411 = vector.extract_strided_slice %408 {offsets = [0, 5, 0], sizes = [4, 1, 64], strides = [1, 1, 1]} : vector<4x8x64xf32> to vector<4x1x64xf32>
    %412 = vector.extract_strided_slice %408 {offsets = [0, 4, 0], sizes = [4, 1, 64], strides = [1, 1, 1]} : vector<4x8x64xf32> to vector<4x1x64xf32>
    %413 = vector.extract_strided_slice %408 {offsets = [0, 3, 0], sizes = [4, 1, 64], strides = [1, 1, 1]} : vector<4x8x64xf32> to vector<4x1x64xf32>
    %414 = vector.extract_strided_slice %408 {offsets = [0, 2, 0], sizes = [4, 1, 64], strides = [1, 1, 1]} : vector<4x8x64xf32> to vector<4x1x64xf32>
    %415 = vector.extract_strided_slice %408 {offsets = [0, 1, 0], sizes = [4, 1, 64], strides = [1, 1, 1]} : vector<4x8x64xf32> to vector<4x1x64xf32>
    %416 = vector.extract_strided_slice %408 {offsets = [0, 0, 0], sizes = [4, 1, 64], strides = [1, 1, 1]} : vector<4x8x64xf32> to vector<4x1x64xf32>
    %417 = tpu.concatenate %409, %410, %411, %412, %413, %414, %415, %416 in 1 : vector<4x1x64xf32>, vector<4x1x64xf32>, vector<4x1x64xf32>, vector<4x1x64xf32>, vector<4x1x64xf32>, vector<4x1x64xf32>, vector<4x1x64xf32>, vector<4x1x64xf32> -> vector<4x8x64xf32>
    %418 = arith.addf %407, %417 : vector<4x8x64xf32>
    %419 = vector.shape_cast %12 : vector<32x64xf32> to vector<4x8x64xf32>
    %cst_28 = arith.constant 0.000000e+00 : f32
    %420 = vector.broadcast %cst_28 : f32 to vector<4x8x64xf32>
    %421 = arith.subf %420, %419 : vector<4x8x64xf32>
    %422 = math.exp %421 : vector<4x8x64xf32>
    %cst_29 = arith.constant 1.000000e+00 : f32
    %423 = vector.broadcast %cst_29 : f32 to vector<4x8x64xf32>
    %424 = arith.addf %423, %422 : vector<4x8x64xf32>
    %cst_30 = arith.constant 1.000000e+00 : f32
    %425 = vector.broadcast %cst_30 : f32 to vector<4x8x64xf32>
    %426 = arith.divf %425, %424 : vector<4x8x64xf32>
    %427 = arith.mulf %419, %426 : vector<4x8x64xf32>
    %428 = arith.mulf %418, %427 : vector<4x8x64xf32>
    %429 = vector.shape_cast %428 : vector<4x8x64xf32> to vector<32x64xf32>
    %c0_31 = arith.constant 0 : index
    %c0_32 = arith.constant 0 : index
    %430 = vector.load %arg5[%c0_31, %c0_32] : memref<64x32xf32, #tpu.memory_space<vmem>>, vector<64x32xf32>
    %cst_33 = arith.constant dense<0.000000e+00> : vector<32x32xf32>
    %431 = tpu.matmul %429, %430, %cst_33 {dimension_numbers = #tpu.dot_dimension_numbers<[1], [0], [0], [1], [0, 0, 1, 1], [], []>} : vector<32x64xf32>, vector<64x32xf32>, vector<32x32xf32> -> vector<32x32xf32>
    %cst_34 = arith.constant dense<0.000000e+00> : vector<32xf32>
    %432 = vector.multi_reduction <add>, %431, %cst_34 [1] : vector<32x32xf32> to vector<32xf32>
    %433 = vector.shape_cast %432 : vector<32xf32> to vector<32x1xf32>
    %cst_35 = arith.constant 3.200000e+01 : f32
    %434 = vector.broadcast %cst_35 : f32 to vector<32x1xf32>
    %435 = arith.divf %433, %434 : vector<32x1xf32>
    %436 = vector.broadcast %435 : vector<32x1xf32> to vector<32x32xf32>
    %437 = arith.subf %431, %436 : vector<32x32xf32>
    %438 = arith.mulf %437, %437 : vector<32x32xf32>
    %cst_36 = arith.constant dense<0.000000e+00> : vector<32xf32>
    %439 = vector.multi_reduction <add>, %438, %cst_36 [1] : vector<32x32xf32> to vector<32xf32>
    %440 = vector.shape_cast %439 : vector<32xf32> to vector<32x1xf32>
    %cst_37 = arith.constant 3.200000e+01 : f32
    %441 = vector.broadcast %cst_37 : f32 to vector<32x1xf32>
    %442 = arith.divf %440, %441 : vector<32x1xf32>
    %443 = vector.broadcast %435 : vector<32x1xf32> to vector<32x32xf32>
    %444 = arith.subf %431, %443 : vector<32x32xf32>
    %cst_38 = arith.constant 9.99999997E-7 : f32
    %445 = vector.broadcast %cst_38 : f32 to vector<32x1xf32>
    %446 = arith.addf %442, %445 : vector<32x1xf32>
    %447 = math.rsqrt %446 : vector<32x1xf32>
    %448 = vector.broadcast %447 : vector<32x1xf32> to vector<32x32xf32>
    %449 = arith.mulf %444, %448 : vector<32x32xf32>
    %450 = vector.extract_strided_slice %449 {offsets = [0, 0], sizes = [16, 32], strides = [1, 1]} : vector<32x32xf32> to vector<16x32xf32>
    %c0_39 = arith.constant 0 : index
    %c0_40 = arith.constant 0 : index
    %451 = vector.load %arg7[%c0_39, %c0_40] : memref<8x32xf32, #tpu.memory_space<vmem>>, vector<1x32xf32>
    %452 = vector.broadcast %451 : vector<1x32xf32> to vector<16x32xf32>
    %453 = arith.mulf %450, %452 : vector<16x32xf32>
    %454 = arith.addf %6, %453 : vector<16x32xf32>
    %c1 = arith.constant 1 : index
    %c0_41 = arith.constant 0 : index
    %455 = vector.load %arg7[%c1, %c0_41] : memref<8x32xf32, #tpu.memory_space<vmem>>, vector<1x32xf32>
    %456 = vector.broadcast %455 : vector<1x32xf32> to vector<16x32xf32>
    %457 = arith.addf %454, %456 : vector<16x32xf32>
    %c0_42 = arith.constant 0 : index
    %c0_43 = arith.constant 0 : index
    %458 = vector.load %arg8[%c0_42, %c0_43] : memref<16x32xf32, #tpu.memory_space<vmem>>, vector<16x32xf32>
    tpu.vector_store %arg8[%c0_42, %c0_43], %457 {strides = array<i32>} : memref<16x32xf32, #tpu.memory_space<vmem>>, vector<16x32xf32>,
    %459 = vector.extract_strided_slice %449 {offsets = [16, 0], sizes = [16, 32], strides = [1, 1]} : vector<32x32xf32> to vector<16x32xf32>
    %c2 = arith.constant 2 : index
    %c0_44 = arith.constant 0 : index
    %460 = vector.load %arg7[%c2, %c0_44] : memref<8x32xf32, #tpu.memory_space<vmem>>, vector<1x32xf32>
    %461 = vector.broadcast %460 : vector<1x32xf32> to vector<16x32xf32>
    %462 = arith.mulf %459, %461 : vector<16x32xf32>
    %463 = arith.addf %7, %462 : vector<16x32xf32>
    %c3 = arith.constant 3 : index
    %c0_45 = arith.constant 0 : index
    %464 = vector.load %arg7[%c3, %c0_45] : memref<8x32xf32, #tpu.memory_space<vmem>>, vector<1x32xf32>
    %465 = vector.broadcast %464 : vector<1x32xf32> to vector<16x32xf32>
    %466 = arith.addf %463, %465 : vector<16x32xf32>
    %c0_46 = arith.constant 0 : index
    %c0_47 = arith.constant 0 : index
    %467 = vector.load %arg9[%c0_46, %c0_47] : memref<16x32xf32, #tpu.memory_space<vmem>>, vector<16x32xf32>
    tpu.vector_store %arg9[%c0_46, %c0_47], %466 {strides = array<i32>} : memref<16x32xf32, #tpu.memory_space<vmem>>, vector<16x32xf32>,
    return
  }
  func.func @transform_0(%arg0: i32) -> (i32, i32) {
    %c0_i32 = arith.constant 0 : i32
    %c0_i32_0 = arith.constant 0 : i32
    %c0_i32_1 = arith.constant 0 : i32
    return %c0_i32, %c0_i32_0 : i32, i32
  }
  func.func @transform_1(%arg0: i32) -> (i32, i32) {
    %c0_i32 = arith.constant 0 : i32
    %c0_i32_0 = arith.constant 0 : i32
    %c0_i32_1 = arith.constant 0 : i32
    return %c0_i32, %c0_i32_0 : i32, i32
  }
  func.func @transform_2(%arg0: i32) -> (i32, i32) {
    %c0_i32 = arith.constant 0 : i32
    %c0_i32_0 = arith.constant 0 : i32
    %c0_i32_1 = arith.constant 0 : i32
    return %c0_i32, %c0_i32_0 : i32, i32
  }
  func.func @transform_3(%arg0: i32) -> (i32, i32) {
    %c0_i32 = arith.constant 0 : i32
    %c0_i32_0 = arith.constant 0 : i32
    %c0_i32_1 = arith.constant 0 : i32
    return %c0_i32, %c0_i32_0 : i32, i32
  }
  func.func @transform_4(%arg0: i32) -> (i32, i32) {
    %c0_i32 = arith.constant 0 : i32
    %c0_i32_0 = arith.constant 0 : i32
    %c0_i32_1 = arith.constant 0 : i32
    return %c0_i32, %c0_i32_0 : i32, i32
  }
  func.func @transform_5(%arg0: i32) -> (i32, i32) {
    %c0_i32 = arith.constant 0 : i32
    %c0_i32_0 = arith.constant 0 : i32
    %c0_i32_1 = arith.constant 0 : i32
    return %c0_i32, %c0_i32_0 : i32, i32
  }
  func.func @transform_6(%arg0: i32) -> (i32, i32) {
    %c0_i32 = arith.constant 0 : i32
    %c0_i32_0 = arith.constant 0 : i32
    %c0_i32_1 = arith.constant 0 : i32
    return %c0_i32, %c0_i32_0 : i32, i32
  }
  func.func @transform_7(%arg0: i32) -> (i32, i32) {
    %c0_i32 = arith.constant 0 : i32
    %c0_i32_0 = arith.constant 0 : i32
    %c0_i32_1 = arith.constant 0 : i32
    return %c0_i32, %c0_i32_0 : i32, i32
  }
  func.func @transform_8(%arg0: i32) -> (i32, i32) {
    %c0_i32 = arith.constant 0 : i32
    %c0_i32_0 = arith.constant 0 : i32
    %c0_i32_1 = arith.constant 0 : i32
    return %c0_i32, %c0_i32_0 : i32, i32
  }
}

</mosaic_0001>

<llo_original>
// kernel: mm_mamba_encoder_layer.1
$region0: #{mm_mamba_encoder_layer.1}
  #allocation0 [shape = 'u32[]', space=smem, size = 0x4, offset = 0x4, fixed_abs, tag = 'smem constant byte address 0x4 - core index']
  #allocation1 [shape = 'u32[144,128]{1,0:T(1,128)}', space=vmem, size = 0x12000, scoped, tag = 'internal scratch']
  %s0 = inlined_call_operand.vmem [shape: f32[16,32], index: 0, kind: input, shape index: {}]
  %s1 = inlined_call_operand.vmem [shape: f32[16,32], index: 1, kind: input, shape index: {}]
  %s2 = inlined_call_operand.vmem [shape: f32[32,128], index: 2, kind: input, shape index: {}]
  %s3 = inlined_call_operand.hbm [shape: f32[128,256], index: 3, kind: input, shape index: {}]
  %s4 = inlined_call_operand.vmem [shape: f32[64,32], index: 4, kind: input, shape index: {}]
  %s5 = inlined_call_operand.vmem [shape: f32[24,128], index: 5, kind: input, shape index: {}]
  %s6 = inlined_call_operand.vmem [shape: f32[8,32], index: 6, kind: input, shape index: {}]
  %s7 = inlined_call_operand.hbm [shape: f32[16,32], index: 7, kind: output, shape index: {0}]
  %s8 = inlined_call_operand.hbm [shape: f32[16,32], index: 8, kind: output, shape index: {1}]
  %9 = xla_tuple %s7, %s8
  %s10 = sld [smem:[#allocation0]]
  $region50: #{mm_mamba_encoder_layer.1} parent=0
    _
  %s12 = ssub.s32 1, %s10
  %s13 = scalar_select 0, %s12, %s10
  $region1: #{mm_mamba_encoder_layer.1} parent=0
    #allocation2 [shape = 'u8[131072]{0}', space=vmem, size = 0x20000, scoped, tag = 'input window, operand 3, single buffered']
    #allocation3 [shape = 's32[1]{0}', space=sflag, size = 0x4, scoped, tag = 'scoped memory for mm_mamba_encoder_layer.1']
    #allocation4 [shape = 's32[1]{0}', space=sflag, size = 0x4, scoped, tag = 'scoped memory for mm_mamba_encoder_layer.1']
    #allocation5 [shape = 'u8[8192]{0}', space=vmem, size = 0x2000, scoped, tag = 'output window, operand 0, single buffered']
    #allocation6 [shape = 'u8[8192]{0}', space=vmem, size = 0x2000, scoped, tag = 'output window, operand 1, single buffered']
    #allocation7 [shape = 's32[1]{0}', space=sflag, size = 0x4, scoped, tag = 'scoped memory for mm_mamba_encoder_layer.1']
    %14 = vsyncpa [#allocation3], 0
    %15 = vsyncpa [#allocation4], 0
    %16 = vsyncpa [#allocation7], 0
    // Predicated region
    $region2: #{mm_mamba_encoder_layer.1} parent=1 // pred_check
      _
    $region3: #{mm_mamba_encoder_layer.1} parent=1 // pred_check_branch
      %18 = sbr.rel (0) target = $region5
    $region4: #{mm_mamba_encoder_layer.1} parent=1 // pred_region
      _
    $region5: #{mm_mamba_encoder_layer.1} parent=1 // pred_fallthru
      _
    // Predicated region
    $region6: #{mm_mamba_encoder_layer.1} parent=1 // pred_check
      _
    $region7: #{mm_mamba_encoder_layer.1} parent=1 // pred_check_branch
      %20 = sbr.rel (0) target = $region9
    $region8: #{mm_mamba_encoder_layer.1} parent=1 // pred_region
      _
    $region9: #{mm_mamba_encoder_layer.1} parent=1 // pred_fallthru
      _
    // Predicated region
    $region10: #{mm_mamba_encoder_layer.1} parent=1 // pred_check
      _
    $region11: #{mm_mamba_encoder_layer.1} parent=1 // pred_check_branch
      %22 = sbr.rel (0) target = $region13
    $region12: #{mm_mamba_encoder_layer.1} parent=1 // pred_region
      _
    $region13: #{mm_mamba_encoder_layer.1} parent=1 // pred_fallthru
      _
    // Predicated region
    $region14: #{mm_mamba_encoder_layer.1} parent=1 // pred_check
      _
    $region15: #{mm_mamba_encoder_layer.1} parent=1 // pred_check_branch
      %24 = sbr.rel (0) target = $region17
    $region16: #{mm_mamba_encoder_layer.1} parent=1 // pred_region
      %s26 = ssub.s32 4096, 4096
      %27 = vsyncadd [#allocation3], %s26
      %s28 = sshll.u32 [#allocation2], 4
      %s29 = int_to_ptr.vmem [resolvable:$true] %s28
      %34 = dma.hbm_to_vmem [thread:$0]  %s3, 4096, %s29, [#allocation3], 256, 256, 16
    $region17: #{mm_mamba_encoder_layer.1} parent=1 // pred_fallthru
      _
    // Predicated region
    $region18: #{mm_mamba_encoder_layer.1} parent=1 // pred_check
      _
    $region19: #{mm_mamba_encoder_layer.1} parent=1 // pred_check_branch
      %36 = sbr.rel (0) target = $region21
    $region20: #{mm_mamba_encoder_layer.1} parent=1 // pred_region
      _
    $region21: #{mm_mamba_encoder_layer.1} parent=1 // pred_fallthru
      _
    // Predicated region
    $region22: #{mm_mamba_encoder_layer.1} parent=1 // pred_check
      _
    $region23: #{mm_mamba_encoder_layer.1} parent=1 // pred_check_branch
      %38 = sbr.rel (0) target = $region25
    $region24: #{mm_mamba_encoder_layer.1} parent=1 // pred_region
      _
    $region25: #{mm_mamba_encoder_layer.1} parent=1 // pred_fallthru
      _
    // Predicated region
    $region26: #{mm_mamba_encoder_layer.1} parent=1 // pred_check
      _
    $region27: #{mm_mamba_encoder_layer.1} parent=1 // pred_check_branch
      %40 = sbr.rel (0) target = $region29
    $region28: #{mm_mamba_encoder_layer.1} parent=1 // pred_region
      _
    $region29: #{mm_mamba_encoder_layer.1} parent=1 // pred_fallthru
      _
    // Predicated region
    $region30: #{mm_mamba_encoder_layer.1} parent=1 // pred_check
      _
    $region31: #{mm_mamba_encoder_layer.1} parent=1 // pred_check_branch
      %42 = sbr.rel (0) target = $region33
    $region32: #{mm_mamba_encoder_layer.1} parent=1 // pred_region
      %43 = dma.done [#allocation3], 4096
    $region33: #{mm_mamba_encoder_layer.1} parent=1 // pred_fallthru
      _
    %v44 = vld [vmem:[%s5] sm:$0xff]
    %v45 = vld [vmem:[%s5 + $0x8] sm:$0xf]
    %v46 = vld [vmem:[%s5 + $0x10] sm:$0xff]
    %v47 = vld [vmem:[%s0] sm:$0xff]
    %v48 = vld [vmem:[%s0 + $0x8] sm:$0xff]
    %v49 = vld [vmem:[%s1] sm:$0xff]
    %v50 = vld [vmem:[%s1 + $0x8] sm:$0xff]
    %v51 = vld [vmem:[%s2] sm:$0xff]
    %v52 = vld [vmem:[%s2 + $0x8] sm:$0xff]
    %v53 = vld [vmem:[%s2 + $0x10] sm:$0xff]
    %v54 = vld [vmem:[%s2 + $0x18] sm:$0xff]
    %vm55 = vcmask 261120
    %v57 = vsel %vm55, %v47, 0
    %v60 = vsel %vm55, %v48, 0
    %v63 = vsel %vm55, %v49, 0
    %v66 = vsel %vm55, %v50, 0
    %68 = vmatprep.subr.mxu0 0.0
    %69 = vmatpush1.msra.mxu0 %v51
    %70 = vmatprep.subr.mxu0 0.0
    %71 = vmatpush1.msra.mxu0 %v52
    %72 = vmatprep.subr.mxu0 0.0
    %73 = vmatpush1.msra.mxu0 %v53
    %74 = vmatprep.subr.mxu0 0.0
    %75 = vmatpush1.msra.mxu0 %v54
    %76 = vmatprep.subr.mxu0 0.0
    %77 = vmatpush1.msra.mxu0 0.0
    %78 = vmatprep.subr.mxu0 0.0
    %79 = vmatpush1.msra.mxu0 0.0
    %80 = vmatprep.subr.mxu0 0.0
    %81 = vmatpush1.msra.mxu0 0.0
    %82 = vmatprep.subr.mxu0 0.0
    %83 = vmatpush1.msra.mxu0 0.0
    %84 = vmatprep.subr.mxu0 0.0
    %85 = vmatpush1.msra.mxu0 0.0
    %86 = vmatprep.subr.mxu0 0.0
    %87 = vmatpush1.msra.mxu0 0.0
    %88 = vmatprep.subr.mxu0 0.0
    %89 = vmatpush1.msra.mxu0 0.0
    %90 = vmatprep.subr.mxu0 0.0
    %91 = vmatpush1.msra.mxu0 0.0
    %92 = vmatprep.subr.mxu0 0.0
    %93 = vmatpush1.msra.mxu0 0.0
    %94 = vmatprep.subr.mxu0 0.0
    %95 = vmatpush1.msra.mxu0 0.0
    %96 = vmatprep.subr.mxu0 0.0
    %97 = vmatpush1.msra.mxu0 0.0
    %98 = vmatprep.subr.mxu0 0.0
    %99 = vmatpush1.msra.mxu0 0.0
    %100 = vmatprep.subr.mxu0 0.0
    %101 = vmatpush1.msra.mxu0 0.0
    %102 = vmatprep.subr.mxu0 0.0
    %103 = vmatpush1.msra.mxu0 0.0
    %104 = vmatprep.subr.mxu0 0.0
    %105 = vmatpush1.msra.mxu0 0.0
    %106 = vmatprep.subr.mxu0 0.0
    %107 = vmatpush1.msra.mxu0 0.0
    %108 = vmatprep.subr.mxu0 0.0
    %109 = vmatpush1.msra.mxu0 0.0
    %110 = vmatprep.subr.mxu0 0.0
    %111 = vmatpush1.msra.mxu0 0.0
    %112 = vmatprep.subr.mxu0 0.0
    %113 = vmatpush1.msra.mxu0 0.0
    %114 = vmatprep.subr.mxu0 0.0
    %115 = vmatpush1.msra.mxu0 0.0
    %116 = vmatprep.subr.mxu0 0.0
    %117 = vmatpush1.msra.mxu0 0.0
    %118 = vmatprep.subr.mxu0 0.0
    %119 = vmatpush1.msra.mxu0 0.0
    %120 = vmatprep.subr.mxu0 0.0
    %121 = vmatpush1.msra.mxu0 0.0
    %122 = vmatprep.subr.mxu0 0.0
    %123 = vmatpush1.msra.mxu0 0.0
    %124 = vmatprep.subr.mxu0 0.0
    %125 = vmatpush1.msra.mxu0 0.0
    %126 = vmatprep.subr.mxu0 0.0
    %127 = vmatpush1.msra.mxu0 0.0
    %128 = vmatprep.subr.mxu0 0.0
    %129 = vmatpush1.msra.mxu0 0.0
    %130 = vmatprep.subr.mxu0 0.0
    %131 = vmatpush1.msra.mxu0 0.0
    %132 = vmatprep.mubr.f32.mxu0 0.0
    %133 = vmatmul.mubr.f32.gmra.mrb[0].mxu0 %v57
    %v134 = vpop.f32.mrb[0].mxu0
    %v135 = vadd.f32 0.0, %v134
    %v136 = vpop.f32.mrb[0].mxu0
    %137 = vmatprep.mubr.f32.mxu0 0.0
    %138 = vmatmul.mubr.f32.gmra.mrb[0].mxu0 %v60
    %v139 = vpop.f32.mrb[0].mxu0
    %v140 = vadd.f32 0.0, %v139
    %v141 = vpop.f32.mrb[0].mxu0
    %142 = vmatprep.mubr.f32.mxu0 0.0
    %143 = vmatmul.mubr.f32.gmra.mrb[0].mxu0 %v63
    %v144 = vpop.f32.mrb[0].mxu0
    %v145 = vadd.f32 0.0, %v144
    %v146 = vpop.f32.mrb[0].mxu0
    %147 = vmatprep.mubr.f32.mxu0 0.0
    %148 = vmatmul.mubr.f32.gmra.mrb[0].mxu0 %v66
    %v149 = vpop.f32.mrb[0].mxu0
    %v150 = vadd.f32 0.0, %v149
    %v151 = vpop.f32.mrb[0].mxu0
    %152 = vdwg.mxu0
    %v157 = vrot.slane %v135, 7
    %v158 = vrot.slane %v140, 7
    %v159 = vrot.slane %v145, 7
    %v160 = vrot.slane %v150, 7
    %v165 = vrot.slane %v135, 5
    %v166 = vrot.slane %v140, 5
    %v167 = vrot.slane %v145, 5
    %v168 = vrot.slane %v150, 5
    %v173 = vrot.slane %v135, 3
    %v174 = vrot.slane %v140, 3
    %v175 = vrot.slane %v145, 3
    %v176 = vrot.slane %v150, 3
    %v181 = vrot.slane %v135, 1
    %v182 = vrot.slane %v140, 1
    %v183 = vrot.slane %v145, 1
    %v184 = vrot.slane %v150, 1
    %vm189 = vcmask 1040384
    %v190 = vsel %vm189, %v157, %v165
    %v191 = vsel %vm189, %v158, %v166
    %v192 = vsel %vm189, %v159, %v167
    %v193 = vsel %vm189, %v160, %v168
    %vm194 = vcmask 1041408
    %v195 = vsel %vm194, %v190, %v173
    %v196 = vsel %vm194, %v191, %v174
    %v197 = vsel %vm194, %v192, %v175
    %v198 = vsel %vm194, %v193, %v176
    %vm199 = vcmask 1042432
    %v200 = vsel %vm199, %v195, %v181
    %v201 = vsel %vm199, %v196, %v182
    %v202 = vsel %vm199, %v197, %v183
    %v203 = vsel %vm199, %v198, %v184
    %vm204 = vcmask 1043456
    %v205 = vsel %vm204, %v200, %v157
    %v206 = vsel %vm204, %v201, %v158
    %v207 = vsel %vm204, %v202, %v159
    %v208 = vsel %vm204, %v203, %v160
    %vm209 = vcmask 1044480
    %v210 = vsel %vm209, %v205, %v165
    %v211 = vsel %vm209, %v206, %v166
    %v212 = vsel %vm209, %v207, %v167
    %v213 = vsel %vm209, %v208, %v168
    %vm214 = vcmask 1045504
    %v215 = vsel %vm214, %v210, %v173
    %v216 = vsel %vm214, %v211, %v174
    %v217 = vsel %vm214, %v212, %v175
    %v218 = vsel %vm214, %v213, %v176
    %vm219 = vcmask 1046528
    %v220 = vsel %vm219, %v215, %v181
    %v221 = vsel %vm219, %v216, %v182
    %v222 = vsel %vm219, %v217, %v183
    %v223 = vsel %vm219, %v218, %v184
    %228 = vrot.lane.b32.xlu0 %v220, 64
    %v229 = vpop.permute.xlu0 %228
    %230 = vrot.lane.b32.xlu0 %v221, 64
    %v231 = vpop.permute.xlu0 %230
    %232 = vrot.lane.b32.xlu0 %v222, 64
    %v233 = vpop.permute.xlu0 %232
    %234 = vrot.lane.b32.xlu0 %v223, 64
    %v235 = vpop.permute.xlu0 %234
    %vm240 = vcmask 523264
    %v241 = vsel %vm240, %v135, %v229
    %v242 = vsel %vm240, %v140, %v231
    %v243 = vsel %vm240, %v145, %v233
    %v244 = vsel %vm240, %v150, %v235
    %v249 = vrot.slane %v241, 5
    %v250 = vrot.slane %v242, 5
    %v251 = vrot.slane %v243, 5
    %v252 = vrot.slane %v244, 5
    %v257 = vsel %vm199, 0.0, %v249
    %v258 = vsel %vm199, 0.0, %v250
    %v259 = vsel %vm199, 0.0, %v251
    %v260 = vsel %vm199, 0.0, %v252
    %v261 = vlaneseq
    %v262 = vshrl.u32 %v261, 7
    %v263 = vsub.s32 0, %v262
    %v264 = vrot.slane %v45, %v263
    %v265 = vmul.f32 %v257, %v264
    %v266 = vmul.f32 %v258, %v264
    %v267 = vmul.f32 %v259, %v264
    %v268 = vmul.f32 %v260, %v264
    %v269 = vlaneseq
    %v270 = vshrl.u32 %v269, 7
    %v271 = vsub.s32 0, %v270
    %v272 = vrot.slane %v46, %v271
    %v273 = vadd.f32 %v272, %v265
    %v274 = vadd.f32 %v272, %v266
    %v275 = vadd.f32 %v272, %v267
    %v276 = vadd.f32 %v272, %v268
    %v277 = vlaneseq
    %v278 = vshrl.u32 %v277, 7
    %v279 = vsub.s32 1, %v278
    %v280 = vrot.slane %v45, %v279
    %v281 = vmul.f32 %v257, %v280
    %v282 = vmul.f32 %v249, %v280
    %v283 = vmul.f32 %v258, %v280
    %v284 = vmul.f32 %v250, %v280
    %v285 = vmul.f32 %v259, %v280
    %v286 = vmul.f32 %v251, %v280
    %v287 = vmul.f32 %v260, %v280
    %v288 = vmul.f32 %v252, %v280
    %v297 = vrot.slane %v281, 1
    %v298 = vrot.slane %v282, 1
    %v299 = vsel %vm219, %v297, %v298
    %v300 = vrot.slane %v283, 1
    %v301 = vrot.slane %v284, 1
    %v302 = vsel %vm219, %v300, %v301
    %v303 = vrot.slane %v285, 1
    %v304 = vrot.slane %v286, 1
    %v305 = vsel %vm219, %v303, %v304
    %v306 = vrot.slane %v287, 1
    %v307 = vrot.slane %v288, 1
    %v308 = vsel %vm219, %v306, %v307
    %v313 = vadd.f32 %v273, %v299
    %v314 = vadd.f32 %v274, %v302
    %v315 = vadd.f32 %v275, %v305
    %v316 = vadd.f32 %v276, %v308
    %v317 = vlaneseq
    %v318 = vshrl.u32 %v317, 7
    %v319 = vsub.s32 2, %v318
    %v320 = vrot.slane %v45, %v319
    %v321 = vmul.f32 %v257, %v320
    %v322 = vmul.f32 %v249, %v320
    %v323 = vmul.f32 %v258, %v320
    %v324 = vmul.f32 %v250, %v320
    %v325 = vmul.f32 %v259, %v320
    %v326 = vmul.f32 %v251, %v320
    %v327 = vmul.f32 %v260, %v320
    %v328 = vmul.f32 %v252, %v320
    %v337 = vrot.slane %v321, 2
    %v338 = vrot.slane %v322, 2
    %v339 = vsel %vm214, %v337, %v338
    %v340 = vrot.slane %v323, 2
    %v341 = vrot.slane %v324, 2
    %v342 = vsel %vm214, %v340, %v341
    %v343 = vrot.slane %v325, 2
    %v344 = vrot.slane %v326, 2
    %v345 = vsel %vm214, %v343, %v344
    %v346 = vrot.slane %v327, 2
    %v347 = vrot.slane %v328, 2
    %v348 = vsel %vm214, %v346, %v347
    %v353 = vadd.f32 %v313, %v339
    %v354 = vadd.f32 %v314, %v342
    %v355 = vadd.f32 %v315, %v345
    %v356 = vadd.f32 %v316, %v348
    %v357 = vlaneseq
    %v358 = vshrl.u32 %v357, 7
    %v359 = vsub.s32 3, %v358
    %v360 = vrot.slane %v45, %v359
    %v361 = vmul.f32 %v257, %v360
    %v362 = vmul.f32 %v249, %v360
    %v363 = vmul.f32 %v258, %v360
    %v364 = vmul.f32 %v250, %v360
    %v365 = vmul.f32 %v259, %v360
    %v366 = vmul.f32 %v251, %v360
    %v367 = vmul.f32 %v260, %v360
    %v368 = vmul.f32 %v252, %v360
    %v377 = vrot.slane %v361, 3
    %v378 = vrot.slane %v362, 3
    %v379 = vsel %vm209, %v377, %v378
    %v380 = vrot.slane %v363, 3
    %v381 = vrot.slane %v364, 3
    %v382 = vsel %vm209, %v380, %v381
    %v383 = vrot.slane %v365, 3
    %v384 = vrot.slane %v366, 3
    %v385 = vsel %vm209, %v383, %v384
    %v386 = vrot.slane %v367, 3
    %v387 = vrot.slane %v368, 3
    %v388 = vsel %vm209, %v386, %v387
    %v393 = vadd.f32 %v353, %v379
    %v394 = vadd.f32 %v354, %v382
    %v395 = vadd.f32 %v355, %v385
    %v396 = vadd.f32 %v356, %v388
    %v397 = vsub.f32 0.0, %v393
    %v398 = vsub.f32 0.0, %v394
    %v399 = vsub.f32 0.0, %v395
    %v400 = vsub.f32 0.0, %v396
    %v401 = vmul.f32 %v397, 1.442695
    %v402 = vpow.pop %v401
    %v403 = vmul.f32 %v398, 1.442695
    %v404 = vpow.pop %v403
    %v405 = vmul.f32 %v399, 1.442695
    %v406 = vpow.pop %v405
    %v407 = vmul.f32 %v400, 1.442695
    %v408 = vpow.pop %v407
    %v409 = vadd.f32 %v402, 1.0
    %v410 = vadd.f32 %v404, 1.0
    %v411 = vadd.f32 %v406, 1.0
    %v412 = vadd.f32 %v408, 1.0
    %v413 = vrcp.pop %v409
    %v414 = vmul.f32 1.0, %v413
    %v415 = vrcp.pop %v410
    %v416 = vmul.f32 1.0, %v415
    %v417 = vrcp.pop %v411
    %v418 = vmul.f32 1.0, %v417
    %v419 = vrcp.pop %v412
    %v420 = vmul.f32 1.0, %v419
    %v421 = vmul.f32 %v393, %v414
    %v422 = vmul.f32 %v394, %v416
    %v423 = vmul.f32 %v395, %v418
    %v424 = vmul.f32 %v396, %v420
    %v425 = vld [vmem:[#allocation2] sm:$0xff]
    %v426 = vld [vmem:[#allocation2 + $0x8] sm:$0xff]
    %v427 = vld [vmem:[#allocation2 + $0x10] sm:$0xff]
    %v428 = vld [vmem:[#allocation2 + $0x18] sm:$0xff]
    %v429 = vld [vmem:[#allocation2 + $0x20] sm:$0xff]
    %v430 = vld [vmem:[#allocation2 + $0x28] sm:$0xff]
    %v431 = vld [vmem:[#allocation2 + $0x30] sm:$0xff]
    %v432 = vld [vmem:[#allocation2 + $0x38] sm:$0xff]
    %v433 = vld [vmem:[#allocation2 + $0x40] sm:$0xff]
    %v434 = vld [vmem:[#allocation2 + $0x48] sm:$0xff]
    %v435 = vld [vmem:[#allocation2 + $0x50] sm:$0xff]
    %v436 = vld [vmem:[#allocation2 + $0x58] sm:$0xff]
    %v437 = vld [vmem:[#allocation2 + $0x60] sm:$0xff]
    %v438 = vld [vmem:[#allocation2 + $0x68] sm:$0xff]
    %v439 = vld [vmem:[#allocation2 + $0x70] sm:$0xff]
    %v440 = vld [vmem:[#allocation2 + $0x78] sm:$0xff]
    %v441 = vld [vmem:[#allocation2 + $0x80] sm:$0xff]
    %v442 = vld [vmem:[#allocation2 + $0x88] sm:$0xff]
    %v443 = vld [vmem:[#allocation2 + $0x90] sm:$0xff]
    %v444 = vld [vmem:[#allocation2 + $0x98] sm:$0xff]
    %v445 = vld [vmem:[#allocation2 + $0xa0] sm:$0xff]
    %v446 = vld [vmem:[#allocation2 + $0xa8] sm:$0xff]
    %v447 = vld [vmem:[#allocation2 + $0xb0] sm:$0xff]
    %v448 = vld [vmem:[#allocation2 + $0xb8] sm:$0xff]
    %v449 = vld [vmem:[#allocation2 + $0xc0] sm:$0xff]
    %v450 = vld [vmem:[#allocation2 + $0xc8] sm:$0xff]
    %v451 = vld [vmem:[#allocation2 + $0xd0] sm:$0xff]
    %v452 = vld [vmem:[#allocation2 + $0xd8] sm:$0xff]
    %v453 = vld [vmem:[#allocation2 + $0xe0] sm:$0xff]
    %v454 = vld [vmem:[#allocation2 + $0xe8] sm:$0xff]
    %v455 = vld [vmem:[#allocation2 + $0xf0] sm:$0xff]
    %v456 = vld [vmem:[#allocation2 + $0xf8] sm:$0xff]
    %457 = vmatprep.subr.mxu0 %v426
    %458 = vmatpush1.msra.mxu0 %v425
    %459 = vmatprep.subr.mxu0 %v428
    %460 = vmatpush1.msra.mxu0 %v427
    %461 = vmatprep.subr.mxu0 %v430
    %462 = vmatpush1.msra.mxu0 %v429
    %463 = vmatprep.subr.mxu0 %v432
    %464 = vmatpush1.msra.mxu0 %v431
    %465 = vmatprep.subr.mxu0 %v434
    %466 = vmatpush1.msra.mxu0 %v433
    %467 = vmatprep.subr.mxu0 %v436
    %468 = vmatpush1.msra.mxu0 %v435
    %469 = vmatprep.subr.mxu0 %v438
    %470 = vmatpush1.msra.mxu0 %v437
    %471 = vmatprep.subr.mxu0 %v440
    %472 = vmatpush1.msra.mxu0 %v439
    %473 = vmatprep.subr.mxu0 %v442
    %474 = vmatpush1.msra.mxu0 %v441
    %475 = vmatprep.subr.mxu0 %v444
    %476 = vmatpush1.msra.mxu0 %v443
    %477 = vmatprep.subr.mxu0 %v446
    %478 = vmatpush1.msra.mxu0 %v445
    %479 = vmatprep.subr.mxu0 %v448
    %480 = vmatpush1.msra.mxu0 %v447
    %481 = vmatprep.subr.mxu0 %v450
    %482 = vmatpush1.msra.mxu0 %v449
    %483 = vmatprep.subr.mxu0 %v452
    %484 = vmatpush1.msra.mxu0 %v451
    %485 = vmatprep.subr.mxu0 %v454
    %486 = vmatpush1.msra.mxu0 %v453
    %487 = vmatprep.subr.mxu0 %v456
    %488 = vmatpush1.msra.mxu0 %v455
    %489 = vmatprep.subr.mxu0 0.0
    %490 = vmatpush1.msra.mxu0 0.0
    %491 = vmatprep.subr.mxu0 0.0
    %492 = vmatpush1.msra.mxu0 0.0
    %493 = vmatprep.subr.mxu0 0.0
    %494 = vmatpush1.msra.mxu0 0.0
    %495 = vmatprep.subr.mxu0 0.0
    %496 = vmatpush1.msra.mxu0 0.0
    %497 = vmatprep.subr.mxu0 0.0
    %498 = vmatpush1.msra.mxu0 0.0
    %499 = vmatprep.subr.mxu0 0.0
    %500 = vmatpush1.msra.mxu0 0.0
    %501 = vmatprep.subr.mxu0 0.0
    %502 = vmatpush1.msra.mxu0 0.0
    %503 = vmatprep.subr.mxu0 0.0
    %504 = vmatpush1.msra.mxu0 0.0
    %505 = vmatprep.subr.mxu0 0.0
    %506 = vmatpush1.msra.mxu0 0.0
    %507 = vmatprep.subr.mxu0 0.0
    %508 = vmatpush1.msra.mxu0 0.0
    %509 = vmatprep.subr.mxu0 0.0
    %510 = vmatpush1.msra.mxu0 0.0
    %511 = vmatprep.subr.mxu0 0.0
    %512 = vmatpush1.msra.mxu0 0.0
    %513 = vmatprep.subr.mxu0 0.0
    %514 = vmatpush1.msra.mxu0 0.0
    %515 = vmatprep.subr.mxu0 0.0
    %516 = vmatpush1.msra.mxu0 0.0
    %517 = vmatprep.subr.mxu0 0.0
    %518 = vmatpush1.msra.mxu0 0.0
    %519 = vmatprep.subr.mxu0 0.0
    %520 = vmatpush1.msra.mxu0 0.0
    %521 = vmatprep.mubr.f32.mxu0 0.0
    %522 = vmatmul.mubr.f32.gmra.mrb[0].mxu0 %v421
    %v523 = vpop.f32.mrb[0].mxu0
    %v524 = vadd.f32 0.0, %v523
    %v525 = vpop.f32.mrb[0].mxu0
    %v526 = vadd.f32 0.0, %v525
    %527 = vmatprep.mubr.f32.mxu0 0.0
    %528 = vmatmul.mubr.f32.gmra.mrb[0].mxu0 %v422
    %v529 = vpop.f32.mrb[0].mxu0
    %v530 = vadd.f32 0.0, %v529
    %v531 = vpop.f32.mrb[0].mxu0
    %v532 = vadd.f32 0.0, %v531
    %533 = vmatprep.mubr.f32.mxu0 0.0
    %534 = vmatmul.mubr.f32.gmra.mrb[0].mxu0 %v423
    %v535 = vpop.f32.mrb[0].mxu0
    %v536 = vadd.f32 0.0, %v535
    %v537 = vpop.f32.mrb[0].mxu0
    %v538 = vadd.f32 0.0, %v537
    %539 = vmatprep.mubr.f32.mxu0 0.0
    %540 = vmatmul.mubr.f32.gmra.mrb[0].mxu0 %v424
    %v541 = vpop.f32.mrb[0].mxu0
    %v542 = vadd.f32 0.0, %v541
    %v543 = vpop.f32.mrb[0].mxu0
    %v544 = vadd.f32 0.0, %v543
    %545 = vdwg.mxu0
    %v546 = vlaneseq
    %v547 = vshrl.u32 %v546, 7
    %v548 = vsub.s32 1, %v547
    %v549 = vrot.slane %v46, %v548
    %v550 = vadd.f32 %v524, %v549
    %v551 = vadd.f32 %v530, %v549
    %v552 = vadd.f32 %v536, %v549
    %v553 = vadd.f32 %v542, %v549
    %vm554 = vcmp.gt.f32.partialorder %v550, 20.0
    %vm555 = vcmp.gt.f32.partialorder %v551, 20.0
    %vm556 = vcmp.gt.f32.partialorder %v552, 20.0
    %vm557 = vcmp.gt.f32.partialorder %v553, 20.0
    %v558 = vmin.f32 %v550, 20.0
    %v559 = vmin.f32 %v551, 20.0
    %v560 = vmin.f32 %v552, 20.0
    %v561 = vmin.f32 %v553, 20.0
    %v562 = vmul.f32 %v558, 1.442695
    %v563 = vpow.pop %v562
    %v564 = vmul.f32 %v559, 1.442695
    %v565 = vpow.pop %v564
    %v566 = vmul.f32 %v560, 1.442695
    %v567 = vpow.pop %v566
    %v568 = vmul.f32 %v561, 1.442695
    %v569 = vpow.pop %v568
    %v570 = vadd.f32 %v563, 1.0
    %v571 = vadd.f32 %v565, 1.0
    %v572 = vadd.f32 %v567, 1.0
    %v573 = vadd.f32 %v569, 1.0
    %v574 = vlog2.pop %v570
    %v575 = vmul.f32 %v574, 0.6931472
    %v576 = vlog2.pop %v571
    %v577 = vmul.f32 %v576, 0.6931472
    %v578 = vlog2.pop %v572
    %v579 = vmul.f32 %v578, 0.6931472
    %v580 = vlog2.pop %v573
    %v581 = vmul.f32 %v580, 0.6931472
    %v582 = vsel %vm554, %v550, %v575
    %v583 = vsel %vm555, %v551, %v577
    %v584 = vsel %vm556, %v552, %v579
    %v585 = vsel %vm557, %v553, %v581
    %v586 = vmul.f32 %v582, %v421
    %v587 = vmul.f32 %v583, %v422
    %v588 = vmul.f32 %v584, %v423
    %v589 = vmul.f32 %v585, %v424
    %v590 = vlaneseq
    %v591 = vshrl.u32 %v590, 7
    %v592 = vsub.s32 0, %v591
    %v593 = vrot.slane %v582, %v592
    %v594 = vlaneseq
    %v595 = vshrl.u32 %v594, 7
    %v596 = vsub.s32 0, %v595
    %v597 = vrot.slane %v583, %v596
    %v598 = vlaneseq
    %v599 = vshrl.u32 %v598, 7
    %v600 = vsub.s32 0, %v599
    %v601 = vrot.slane %v584, %v600
    %v602 = vlaneseq
    %v603 = vshrl.u32 %v602, 7
    %v604 = vsub.s32 0, %v603
    %v605 = vrot.slane %v585, %v604
    %v606 = vmul.f32 %v593, %v44
    %v607 = vmul.f32 %v597, %v44
    %v608 = vmul.f32 %v601, %v44
    %v609 = vmul.f32 %v605, %v44
    %v610 = vmul.f32 %v606, 1.442695
    %v611 = vpow.pop %v610
    %v612 = vmul.f32 %v607, 1.442695
    %v613 = vpow.pop %v612
    %v614 = vmul.f32 %v608, 1.442695
    %v615 = vpow.pop %v614
    %v616 = vmul.f32 %v609, 1.442695
    %v617 = vpow.pop %v616
    %v618 = vlaneseq
    %v619 = vshrl.u32 %v618, 7
    %v620 = vsub.s32 0, %v619
    %v621 = vrot.slane %v526, %v620
    %623 = vbcast.lane.b32.xlu0 %v621, 256
    %v624 = vpop.permute.xlu0 %623
    %v625 = vlaneseq
    %v626 = vshrl.u32 %v625, 7
    %v627 = vsub.s32 0, %v626
    %v628 = vrot.slane %v532, %v627
    %630 = vbcast.lane.b32.xlu0 %v628, 256
    %v631 = vpop.permute.xlu0 %630
    %v632 = vlaneseq
    %v633 = vshrl.u32 %v632, 7
    %v634 = vsub.s32 0, %v633
    %v635 = vrot.slane %v538, %v634
    %637 = vbcast.lane.b32.xlu0 %v635, 256
    %v638 = vpop.permute.xlu0 %637
    %v639 = vlaneseq
    %v640 = vshrl.u32 %v639, 7
    %v641 = vsub.s32 0, %v640
    %v642 = vrot.slane %v544, %v641
    %644 = vbcast.lane.b32.xlu0 %v642, 256
    %v645 = vpop.permute.xlu0 %644
    %s647 = sor.u32 256, 8
    %648 = vbcast.lane.b32.xlu0 %v621, %s647
    %v649 = vpop.permute.xlu0 %648
    %s651 = sor.u32 256, 8
    %652 = vbcast.lane.b32.xlu0 %v628, %s651
    %v653 = vpop.permute.xlu0 %652
    %s655 = sor.u32 256, 8
    %656 = vbcast.lane.b32.xlu0 %v635, %s655
    %v657 = vpop.permute.xlu0 %656
    %s659 = sor.u32 256, 8
    %660 = vbcast.lane.b32.xlu0 %v642, %s659
    %v661 = vpop.permute.xlu0 %660
    %v662 = vsel %vm240, %v624, %v649
    %v663 = vsel %vm240, %v631, %v653
    %v664 = vsel %vm240, %v638, %v657
    %v665 = vsel %vm240, %v645, %v661
    %s667 = sor.u32 256, 16
    %668 = vbcast.lane.b32.xlu0 %v621, %s667
    %v669 = vpop.permute.xlu0 %668
    %s671 = sor.u32 256, 16
    %672 = vbcast.lane.b32.xlu0 %v628, %s671
    %v673 = vpop.permute.xlu0 %672
    %s675 = sor.u32 256, 16
    %676 = vbcast.lane.b32.xlu0 %v635, %s675
    %v677 = vpop.permute.xlu0 %676
    %s679 = sor.u32 256, 16
    %680 = vbcast.lane.b32.xlu0 %v642, %s679
    %v681 = vpop.permute.xlu0 %680
    %s683 = sor.u32 256, 24
    %684 = vbcast.lane.b32.xlu0 %v621, %s683
    %v685 = vpop.permute.xlu0 %684
    %s687 = sor.u32 256, 24
    %688 = vbcast.lane.b32.xlu0 %v628, %s687
    %v689 = vpop.permute.xlu0 %688
    %s691 = sor.u32 256, 24
    %692 = vbcast.lane.b32.xlu0 %v635, %s691
    %v693 = vpop.permute.xlu0 %692
    %s695 = sor.u32 256, 24
    %696 = vbcast.lane.b32.xlu0 %v642, %s695
    %v697 = vpop.permute.xlu0 %696
    %v698 = vsel %vm240, %v669, %v685
    %v699 = vsel %vm240, %v673, %v689
    %v700 = vsel %vm240, %v677, %v693
    %v701 = vsel %vm240, %v681, %v697
    %v702 = vmul.f32 %v611, 0.0
    %v703 = vmul.f32 %v613, 0.0
    %v704 = vmul.f32 %v615, 0.0
    %v705 = vmul.f32 %v617, 0.0
    %v706 = vlaneseq
    %v707 = vshrl.u32 %v706, 7
    %v708 = vsub.s32 0, %v707
    %v709 = vrot.slane %v586, %v708
    %v710 = vlaneseq
    %v711 = vshrl.u32 %v710, 7
    %v712 = vsub.s32 0, %v711
    %v713 = vrot.slane %v587, %v712
    %v714 = vlaneseq
    %v715 = vshrl.u32 %v714, 7
    %v716 = vsub.s32 0, %v715
    %v717 = vrot.slane %v588, %v716
    %v718 = vlaneseq
    %v719 = vshrl.u32 %v718, 7
    %v720 = vsub.s32 0, %v719
    %v721 = vrot.slane %v589, %v720
    %v722 = vmul.f32 %v662, %v709
    %v723 = vmul.f32 %v663, %v713
    %v724 = vmul.f32 %v664, %v717
    %v725 = vmul.f32 %v665, %v721
    %v726 = vadd.f32 %v702, %v722
    %v727 = vadd.f32 %v703, %v723
    %v728 = vadd.f32 %v704, %v724
    %v729 = vadd.f32 %v705, %v725
    %v730 = vmul.f32 %v726, %v698
    %v731 = vmul.f32 %v727, %v699
    %v732 = vmul.f32 %v728, %v700
    %v733 = vmul.f32 %v729, %v701
    %v734 = vrot.slane %v730, 4
    %v735 = vadd.f32 %v730, %v734
    %v736 = vrot.slane %v735, 2
    %v737 = vadd.f32 %v735, %v736
    %v738 = vrot.slane %v737, 1
    %v739 = vadd.f32 %v737, %v738
    %v740 = vrot.slane %v731, 4
    %v741 = vadd.f32 %v731, %v740
    %v742 = vrot.slane %v741, 2
    %v743 = vadd.f32 %v741, %v742
    %v744 = vrot.slane %v743, 1
    %v745 = vadd.f32 %v743, %v744
    %v746 = vrot.slane %v732, 4
    %v747 = vadd.f32 %v732, %v746
    %v748 = vrot.slane %v747, 2
    %v749 = vadd.f32 %v747, %v748
    %v750 = vrot.slane %v749, 1
    %v751 = vadd.f32 %v749, %v750
    %v752 = vrot.slane %v733, 4
    %v753 = vadd.f32 %v733, %v752
    %v754 = vrot.slane %v753, 2
    %v755 = vadd.f32 %v753, %v754
    %v756 = vrot.slane %v755, 1
    %v757 = vadd.f32 %v755, %v756
    %v758 = vlaneseq
    %v759 = vshrl.u32 %v758, 7
    %v760 = vsub.s32 1, %v759
    %v761 = vrot.slane %v582, %v760
    %v762 = vlaneseq
    %v763 = vshrl.u32 %v762, 7
    %v764 = vsub.s32 1, %v763
    %v765 = vrot.slane %v583, %v764
    %v766 = vlaneseq
    %v767 = vshrl.u32 %v766, 7
    %v768 = vsub.s32 1, %v767
    %v769 = vrot.slane %v584, %v768
    %v770 = vlaneseq
    %v771 = vshrl.u32 %v770, 7
    %v772 = vsub.s32 1, %v771
    %v773 = vrot.slane %v585, %v772
    %v774 = vmul.f32 %v761, %v44
    %v775 = vmul.f32 %v765, %v44
    %v776 = vmul.f32 %v769, %v44
    %v777 = vmul.f32 %v773, %v44
    %v778 = vmul.f32 %v774, 1.442695
    %v779 = vpow.pop %v778
    %v780 = vmul.f32 %v775, 1.442695
    %v781 = vpow.pop %v780
    %v782 = vmul.f32 %v776, 1.442695
    %v783 = vpow.pop %v782
    %v784 = vmul.f32 %v777, 1.442695
    %v785 = vpow.pop %v784
    %v786 = vlaneseq
    %v787 = vshrl.u32 %v786, 7
    %v788 = vsub.s32 1, %v787
    %v789 = vrot.slane %v526, %v788
    %791 = vbcast.lane.b32.xlu0 %v789, 256
    %v792 = vpop.permute.xlu0 %791
    %v793 = vlaneseq
    %v794 = vshrl.u32 %v793, 7
    %v795 = vsub.s32 1, %v794
    %v796 = vrot.slane %v532, %v795
    %798 = vbcast.lane.b32.xlu0 %v796, 256
    %v799 = vpop.permute.xlu0 %798
    %v800 = vlaneseq
    %v801 = vshrl.u32 %v800, 7
    %v802 = vsub.s32 1, %v801
    %v803 = vrot.slane %v538, %v802
    %805 = vbcast.lane.b32.xlu0 %v803, 256
    %v806 = vpop.permute.xlu0 %805
    %v807 = vlaneseq
    %v808 = vshrl.u32 %v807, 7
    %v809 = vsub.s32 1, %v808
    %v810 = vrot.slane %v544, %v809
    %812 = vbcast.lane.b32.xlu0 %v810, 256
    %v813 = vpop.permute.xlu0 %812
    %s815 = sor.u32 256, 8
    %816 = vbcast.lane.b32.xlu0 %v789, %s815
    %v817 = vpop.permute.xlu0 %816
    %s819 = sor.u32 256, 8
    %820 = vbcast.lane.b32.xlu0 %v796, %s819
    %v821 = vpop.permute.xlu0 %820
    %s823 = sor.u32 256, 8
    %824 = vbcast.lane.b32.xlu0 %v803, %s823
    %v825 = vpop.permute.xlu0 %824
    %s827 = sor.u32 256, 8
    %828 = vbcast.lane.b32.xlu0 %v810, %s827
    %v829 = vpop.permute.xlu0 %828
    %v830 = vsel %vm240, %v792, %v817
    %v831 = vsel %vm240, %v799, %v821
    %v832 = vsel %vm240, %v806, %v825
    %v833 = vsel %vm240, %v813, %v829
    %s835 = sor.u32 256, 16
    %836 = vbcast.lane.b32.xlu0 %v789, %s835
    %v837 = vpop.permute.xlu0 %836
    %s839 = sor.u32 256, 16
    %840 = vbcast.lane.b32.xlu0 %v796, %s839
    %v841 = vpop.permute.xlu0 %840
    %s843 = sor.u32 256, 16
    %844 = vbcast.lane.b32.xlu0 %v803, %s843
    %v845 = vpop.permute.xlu0 %844
    %s847 = sor.u32 256, 16
    %848 = vbcast.lane.b32.xlu0 %v810, %s847
    %v849 = vpop.permute.xlu0 %848
    %s851 = sor.u32 256, 24
    %852 = vbcast.lane.b32.xlu0 %v789, %s851
    %v853 = vpop.permute.xlu0 %852
    %s855 = sor.u32 256, 24
    %856 = vbcast.lane.b32.xlu0 %v796, %s855
    %v857 = vpop.permute.xlu0 %856
    %s859 = sor.u32 256, 24
    %860 = vbcast.lane.b32.xlu0 %v803, %s859
    %v861 = vpop.permute.xlu0 %860
    %s863 = sor.u32 256, 24
    %864 = vbcast.lane.b32.xlu0 %v810, %s863
    %v865 = vpop.permute.xlu0 %864
    %v866 = vsel %vm240, %v837, %v853
    %v867 = vsel %vm240, %v841, %v857
    %v868 = vsel %vm240, %v845, %v861
    %v869 = vsel %vm240, %v849, %v865
    %v870 = vmul.f32 %v779, %v726
    %v871 = vmul.f32 %v781, %v727
    %v872 = vmul.f32 %v783, %v728
    %v873 = vmul.f32 %v785, %v729
    %v874 = vlaneseq
    %v875 = vshrl.u32 %v874, 7
    %v876 = vsub.s32 1, %v875
    %v877 = vrot.slane %v586, %v876
    %v878 = vlaneseq
    %v879 = vshrl.u32 %v878, 7
    %v880 = vsub.s32 1, %v879
    %v881 = vrot.slane %v587, %v880
    %v882 = vlaneseq
    %v883 = vshrl.u32 %v882, 7
    %v884 = vsub.s32 1, %v883
    %v885 = vrot.slane %v588, %v884
    %v886 = vlaneseq
    %v887 = vshrl.u32 %v886, 7
    %v888 = vsub.s32 1, %v887
    %v889 = vrot.slane %v589, %v888
    %v890 = vmul.f32 %v830, %v877
    %v891 = vmul.f32 %v831, %v881
    %v892 = vmul.f32 %v832, %v885
    %v893 = vmul.f32 %v833, %v889
    %v894 = vadd.f32 %v870, %v890
    %v895 = vadd.f32 %v871, %v891
    %v896 = vadd.f32 %v872, %v892
    %v897 = vadd.f32 %v873, %v893
    %v898 = vmul.f32 %v894, %v866
    %v899 = vmul.f32 %v895, %v867
    %v900 = vmul.f32 %v896, %v868
    %v901 = vmul.f32 %v897, %v869
    %v902 = vrot.slane %v898, 4
    %v903 = vadd.f32 %v898, %v902
    %v904 = vrot.slane %v903, 2
    %v905 = vadd.f32 %v903, %v904
    %v906 = vrot.slane %v905, 1
    %v907 = vadd.f32 %v905, %v906
    %v908 = vrot.slane %v899, 4
    %v909 = vadd.f32 %v899, %v908
    %v910 = vrot.slane %v909, 2
    %v911 = vadd.f32 %v909, %v910
    %v912 = vrot.slane %v911, 1
    %v913 = vadd.f32 %v911, %v912
    %v914 = vrot.slane %v900, 4
    %v915 = vadd.f32 %v900, %v914
    %v916 = vrot.slane %v915, 2
    %v917 = vadd.f32 %v915, %v916
    %v918 = vrot.slane %v917, 1
    %v919 = vadd.f32 %v917, %v918
    %v920 = vrot.slane %v901, 4
    %v921 = vadd.f32 %v901, %v920
    %v922 = vrot.slane %v921, 2
    %v923 = vadd.f32 %v921, %v922
    %v924 = vrot.slane %v923, 1
    %v925 = vadd.f32 %v923, %v924
    %v926 = vlaneseq
    %v927 = vshrl.u32 %v926, 7
    %v928 = vsub.s32 2, %v927
    %v929 = vrot.slane %v582, %v928
    %v930 = vlaneseq
    %v931 = vshrl.u32 %v930, 7
    %v932 = vsub.s32 2, %v931
    %v933 = vrot.slane %v583, %v932
    %v934 = vlaneseq
    %v935 = vshrl.u32 %v934, 7
    %v936 = vsub.s32 2, %v935
    %v937 = vrot.slane %v584, %v936
    %v938 = vlaneseq
    %v939 = vshrl.u32 %v938, 7
    %v940 = vsub.s32 2, %v939
    %v941 = vrot.slane %v585, %v940
    %v942 = vmul.f32 %v929, %v44
    %v943 = vmul.f32 %v933, %v44
    %v944 = vmul.f32 %v937, %v44
    %v945 = vmul.f32 %v941, %v44
    %v946 = vmul.f32 %v942, 1.442695
    %v947 = vpow.pop %v946
    %v948 = vmul.f32 %v943, 1.442695
    %v949 = vpow.pop %v948
    %v950 = vmul.f32 %v944, 1.442695
    %v951 = vpow.pop %v950
    %v952 = vmul.f32 %v945, 1.442695
    %v953 = vpow.pop %v952
    %v954 = vlaneseq
    %v955 = vshrl.u32 %v954, 7
    %v956 = vsub.s32 2, %v955
    %v957 = vrot.slane %v526, %v956
    %959 = vbcast.lane.b32.xlu0 %v957, 256
    %v960 = vpop.permute.xlu0 %959
    %v961 = vlaneseq
    %v962 = vshrl.u32 %v961, 7
    %v963 = vsub.s32 2, %v962
    %v964 = vrot.slane %v532, %v963
    %966 = vbcast.lane.b32.xlu0 %v964, 256
    %v967 = vpop.permute.xlu0 %966
    %v968 = vlaneseq
    %v969 = vshrl.u32 %v968, 7
    %v970 = vsub.s32 2, %v969
    %v971 = vrot.slane %v538, %v970
    %973 = vbcast.lane.b32.xlu0 %v971, 256
    %v974 = vpop.permute.xlu0 %973
    %v975 = vlaneseq
    %v976 = vshrl.u32 %v975, 7
    %v977 = vsub.s32 2, %v976
    %v978 = vrot.slane %v544, %v977
    %980 = vbcast.lane.b32.xlu0 %v978, 256
    %v981 = vpop.permute.xlu0 %980
    %s983 = sor.u32 256, 8
    %984 = vbcast.lane.b32.xlu0 %v957, %s983
    %v985 = vpop.permute.xlu0 %984
    %s987 = sor.u32 256, 8
    %988 = vbcast.lane.b32.xlu0 %v964, %s987
    %v989 = vpop.permute.xlu0 %988
    %s991 = sor.u32 256, 8
    %992 = vbcast.lane.b32.xlu0 %v971, %s991
    %v993 = vpop.permute.xlu0 %992
    %s995 = sor.u32 256, 8
    %996 = vbcast.lane.b32.xlu0 %v978, %s995
    %v997 = vpop.permute.xlu0 %996
    %v998 = vsel %vm240, %v960, %v985
    %v999 = vsel %vm240, %v967, %v989
    %v1000 = vsel %vm240, %v974, %v993
    %v1001 = vsel %vm240, %v981, %v997
    %s1003 = sor.u32 256, 16
    %1004 = vbcast.lane.b32.xlu0 %v957, %s1003
    %v1005 = vpop.permute.xlu0 %1004
    %s1007 = sor.u32 256, 16
    %1008 = vbcast.lane.b32.xlu0 %v964, %s1007
    %v1009 = vpop.permute.xlu0 %1008
    %s1011 = sor.u32 256, 16
    %1012 = vbcast.lane.b32.xlu0 %v971, %s1011
    %v1013 = vpop.permute.xlu0 %1012
    %s1015 = sor.u32 256, 16
    %1016 = vbcast.lane.b32.xlu0 %v978, %s1015
    %v1017 = vpop.permute.xlu0 %1016
    %s1019 = sor.u32 256, 24
    %1020 = vbcast.lane.b32.xlu0 %v957, %s1019
    %v1021 = vpop.permute.xlu0 %1020
    %s1023 = sor.u32 256, 24
    %1024 = vbcast.lane.b32.xlu0 %v964, %s1023
    %v1025 = vpop.permute.xlu0 %1024
    %s1027 = sor.u32 256, 24
    %1028 = vbcast.lane.b32.xlu0 %v971, %s1027
    %v1029 = vpop.permute.xlu0 %1028
    %s1031 = sor.u32 256, 24
    %1032 = vbcast.lane.b32.xlu0 %v978, %s1031
    %v1033 = vpop.permute.xlu0 %1032
    %v1034 = vsel %vm240, %v1005, %v1021
    %v1035 = vsel %vm240, %v1009, %v1025
    %v1036 = vsel %vm240, %v1013, %v1029
    %v1037 = vsel %vm240, %v1017, %v1033
    %v1038 = vmul.f32 %v947, %v894
    %v1039 = vmul.f32 %v949, %v895
    %v1040 = vmul.f32 %v951, %v896
    %v1041 = vmul.f32 %v953, %v897
    %v1042 = vlaneseq
    %v1043 = vshrl.u32 %v1042, 7
    %v1044 = vsub.s32 2, %v1043
    %v1045 = vrot.slane %v586, %v1044
    %v1046 = vlaneseq
    %v1047 = vshrl.u32 %v1046, 7
    %v1048 = vsub.s32 2, %v1047
    %v1049 = vrot.slane %v587, %v1048
    %v1050 = vlaneseq
    %v1051 = vshrl.u32 %v1050, 7
    %v1052 = vsub.s32 2, %v1051
    %v1053 = vrot.slane %v588, %v1052
    %v1054 = vlaneseq
    %v1055 = vshrl.u32 %v1054, 7
    %v1056 = vsub.s32 2, %v1055
    %v1057 = vrot.slane %v589, %v1056
    %v1058 = vmul.f32 %v998, %v1045
    %v1059 = vmul.f32 %v999, %v1049
    %v1060 = vmul.f32 %v1000, %v1053
    %v1061 = vmul.f32 %v1001, %v1057
    %v1062 = vadd.f32 %v1038, %v1058
    %v1063 = vadd.f32 %v1039, %v1059
    %v1064 = vadd.f32 %v1040, %v1060
    %v1065 = vadd.f32 %v1041, %v1061
    %v1066 = vmul.f32 %v1062, %v1034
    %v1067 = vmul.f32 %v1063, %v1035
    %v1068 = vmul.f32 %v1064, %v1036
    %v1069 = vmul.f32 %v1065, %v1037
    %v1070 = vrot.slane %v1066, 4
    %v1071 = vadd.f32 %v1066, %v1070
    %v1072 = vrot.slane %v1071, 2
    %v1073 = vadd.f32 %v1071, %v1072
    %v1074 = vrot.slane %v1073, 1
    %v1075 = vadd.f32 %v1073, %v1074
    %v1076 = vrot.slane %v1067, 4
    %v1077 = vadd.f32 %v1067, %v1076
    %v1078 = vrot.slane %v1077, 2
    %v1079 = vadd.f32 %v1077, %v1078
    %v1080 = vrot.slane %v1079, 1
    %v1081 = vadd.f32 %v1079, %v1080
    %v1082 = vrot.slane %v1068, 4
    %v1083 = vadd.f32 %v1068, %v1082
    %v1084 = vrot.slane %v1083, 2
    %v1085 = vadd.f32 %v1083, %v1084
    %v1086 = vrot.slane %v1085, 1
    %v1087 = vadd.f32 %v1085, %v1086
    %v1088 = vrot.slane %v1069, 4
    %v1089 = vadd.f32 %v1069, %v1088
    %v1090 = vrot.slane %v1089, 2
    %v1091 = vadd.f32 %v1089, %v1090
    %v1092 = vrot.slane %v1091, 1
    %v1093 = vadd.f32 %v1091, %v1092
    %v1094 = vlaneseq
    %v1095 = vshrl.u32 %v1094, 7
    %v1096 = vsub.s32 3, %v1095
    %v1097 = vrot.slane %v582, %v1096
    %v1098 = vlaneseq
    %v1099 = vshrl.u32 %v1098, 7
    %v1100 = vsub.s32 3, %v1099
    %v1101 = vrot.slane %v583, %v1100
    %v1102 = vlaneseq
    %v1103 = vshrl.u32 %v1102, 7
    %v1104 = vsub.s32 3, %v1103
    %v1105 = vrot.slane %v584, %v1104
    %v1106 = vlaneseq
    %v1107 = vshrl.u32 %v1106, 7
    %v1108 = vsub.s32 3, %v1107
    %v1109 = vrot.slane %v585, %v1108
    %v1110 = vmul.f32 %v1097, %v44
    %v1111 = vmul.f32 %v1101, %v44
    %v1112 = vmul.f32 %v1105, %v44
    %v1113 = vmul.f32 %v1109, %v44
    %v1114 = vmul.f32 %v1110, 1.442695
    %v1115 = vpow.pop %v1114
    %v1116 = vmul.f32 %v1111, 1.442695
    %v1117 = vpow.pop %v1116
    %v1118 = vmul.f32 %v1112, 1.442695
    %v1119 = vpow.pop %v1118
    %v1120 = vmul.f32 %v1113, 1.442695
    %v1121 = vpow.pop %v1120
    %v1122 = vlaneseq
    %v1123 = vshrl.u32 %v1122, 7
    %v1124 = vsub.s32 3, %v1123
    %v1125 = vrot.slane %v526, %v1124
    %1127 = vbcast.lane.b32.xlu0 %v1125, 256
    %v1128 = vpop.permute.xlu0 %1127
    %v1129 = vlaneseq
    %v1130 = vshrl.u32 %v1129, 7
    %v1131 = vsub.s32 3, %v1130
    %v1132 = vrot.slane %v532, %v1131
    %1134 = vbcast.lane.b32.xlu0 %v1132, 256
    %v1135 = vpop.permute.xlu0 %1134
    %v1136 = vlaneseq
    %v1137 = vshrl.u32 %v1136, 7
    %v1138 = vsub.s32 3, %v1137
    %v1139 = vrot.slane %v538, %v1138
    %1141 = vbcast.lane.b32.xlu0 %v1139, 256
    %v1142 = vpop.permute.xlu0 %1141
    %v1143 = vlaneseq
    %v1144 = vshrl.u32 %v1143, 7
    %v1145 = vsub.s32 3, %v1144
    %v1146 = vrot.slane %v544, %v1145
    %1148 = vbcast.lane.b32.xlu0 %v1146, 256
    %v1149 = vpop.permute.xlu0 %1148
    %s1151 = sor.u32 256, 8
    %1152 = vbcast.lane.b32.xlu0 %v1125, %s1151
    %v1153 = vpop.permute.xlu0 %1152
    %s1155 = sor.u32 256, 8
    %1156 = vbcast.lane.b32.xlu0 %v1132, %s1155
    %v1157 = vpop.permute.xlu0 %1156
    %s1159 = sor.u32 256, 8
    %1160 = vbcast.lane.b32.xlu0 %v1139, %s1159
    %v1161 = vpop.permute.xlu0 %1160
    %s1163 = sor.u32 256, 8
    %1164 = vbcast.lane.b32.xlu0 %v1146, %s1163
    %v1165 = vpop.permute.xlu0 %1164
    %v1166 = vsel %vm240, %v1128, %v1153
    %v1167 = vsel %vm240, %v1135, %v1157
    %v1168 = vsel %vm240, %v1142, %v1161
    %v1169 = vsel %vm240, %v1149, %v1165
    %s1171 = sor.u32 256, 16
    %1172 = vbcast.lane.b32.xlu0 %v1125, %s1171
    %v1173 = vpop.permute.xlu0 %1172
    %s1175 = sor.u32 256, 16
    %1176 = vbcast.lane.b32.xlu0 %v1132, %s1175
    %v1177 = vpop.permute.xlu0 %1176
    %s1179 = sor.u32 256, 16
    %1180 = vbcast.lane.b32.xlu0 %v1139, %s1179
    %v1181 = vpop.permute.xlu0 %1180
    %s1183 = sor.u32 256, 16
    %1184 = vbcast.lane.b32.xlu0 %v1146, %s1183
    %v1185 = vpop.permute.xlu0 %1184
    %s1187 = sor.u32 256, 24
    %1188 = vbcast.lane.b32.xlu0 %v1125, %s1187
    %v1189 = vpop.permute.xlu0 %1188
    %s1191 = sor.u32 256, 24
    %1192 = vbcast.lane.b32.xlu0 %v1132, %s1191
    %v1193 = vpop.permute.xlu0 %1192
    %s1195 = sor.u32 256, 24
    %1196 = vbcast.lane.b32.xlu0 %v1139, %s1195
    %v1197 = vpop.permute.xlu0 %1196
    %s1199 = sor.u32 256, 24
    %1200 = vbcast.lane.b32.xlu0 %v1146, %s1199
    %v1201 = vpop.permute.xlu0 %1200
    %v1202 = vsel %vm240, %v1173, %v1189
    %v1203 = vsel %vm240, %v1177, %v1193
    %v1204 = vsel %vm240, %v1181, %v1197
    %v1205 = vsel %vm240, %v1185, %v1201
    %v1206 = vmul.f32 %v1115, %v1062
    %v1207 = vmul.f32 %v1117, %v1063
    %v1208 = vmul.f32 %v1119, %v1064
    %v1209 = vmul.f32 %v1121, %v1065
    %v1210 = vlaneseq
    %v1211 = vshrl.u32 %v1210, 7
    %v1212 = vsub.s32 3, %v1211
    %v1213 = vrot.slane %v586, %v1212
    %v1214 = vlaneseq
    %v1215 = vshrl.u32 %v1214, 7
    %v1216 = vsub.s32 3, %v1215
    %v1217 = vrot.slane %v587, %v1216
    %v1218 = vlaneseq
    %v1219 = vshrl.u32 %v1218, 7
    %v1220 = vsub.s32 3, %v1219
    %v1221 = vrot.slane %v588, %v1220
    %v1222 = vlaneseq
    %v1223 = vshrl.u32 %v1222, 7
    %v1224 = vsub.s32 3, %v1223
    %v1225 = vrot.slane %v589, %v1224
    %v1226 = vmul.f32 %v1166, %v1213
    %v1227 = vmul.f32 %v1167, %v1217
    %v1228 = vmul.f32 %v1168, %v1221
    %v1229 = vmul.f32 %v1169, %v1225
    %v1230 = vadd.f32 %v1206, %v1226
    %v1231 = vadd.f32 %v1207, %v1227
    %v1232 = vadd.f32 %v1208, %v1228
    %v1233 = vadd.f32 %v1209, %v1229
    %v1234 = vmul.f32 %v1230, %v1202
    %v1235 = vmul.f32 %v1231, %v1203
    %v1236 = vmul.f32 %v1232, %v1204
    %v1237 = vmul.f32 %v1233, %v1205
    %v1238 = vrot.slane %v1234, 4
    %v1239 = vadd.f32 %v1234, %v1238
    %v1240 = vrot.slane %v1239, 2
    %v1241 = vadd.f32 %v1239, %v1240
    %v1242 = vrot.slane %v1241, 1
    %v1243 = vadd.f32 %v1241, %v1242
    %v1244 = vrot.slane %v1235, 4
    %v1245 = vadd.f32 %v1235, %v1244
    %v1246 = vrot.slane %v1245, 2
    %v1247 = vadd.f32 %v1245, %v1246
    %v1248 = vrot.slane %v1247, 1
    %v1249 = vadd.f32 %v1247, %v1248
    %v1250 = vrot.slane %v1236, 4
    %v1251 = vadd.f32 %v1236, %v1250
    %v1252 = vrot.slane %v1251, 2
    %v1253 = vadd.f32 %v1251, %v1252
    %v1254 = vrot.slane %v1253, 1
    %v1255 = vadd.f32 %v1253, %v1254
    %v1256 = vrot.slane %v1237, 4
    %v1257 = vadd.f32 %v1237, %v1256
    %v1258 = vrot.slane %v1257, 2
    %v1259 = vadd.f32 %v1257, %v1258
    %v1260 = vrot.slane %v1259, 1
    %v1261 = vadd.f32 %v1259, %v1260
    %v1262 = vlaneseq
    %v1263 = vshrl.u32 %v1262, 7
    %v1264 = vsub.s32 4, %v1263
    %v1265 = vrot.slane %v582, %v1264
    %v1266 = vlaneseq
    %v1267 = vshrl.u32 %v1266, 7
    %v1268 = vsub.s32 4, %v1267
    %v1269 = vrot.slane %v583, %v1268
    %v1270 = vlaneseq
    %v1271 = vshrl.u32 %v1270, 7
    %v1272 = vsub.s32 4, %v1271
    %v1273 = vrot.slane %v584, %v1272
    %v1274 = vlaneseq
    %v1275 = vshrl.u32 %v1274, 7
    %v1276 = vsub.s32 4, %v1275
    %v1277 = vrot.slane %v585, %v1276
    %v1278 = vmul.f32 %v1265, %v44
    %v1279 = vmul.f32 %v1269, %v44
    %v1280 = vmul.f32 %v1273, %v44
    %v1281 = vmul.f32 %v1277, %v44
    %v1282 = vmul.f32 %v1278, 1.442695
    %v1283 = vpow.pop %v1282
    %v1284 = vmul.f32 %v1279, 1.442695
    %v1285 = vpow.pop %v1284
    %v1286 = vmul.f32 %v1280, 1.442695
    %v1287 = vpow.pop %v1286
    %v1288 = vmul.f32 %v1281, 1.442695
    %v1289 = vpow.pop %v1288
    %v1290 = vlaneseq
    %v1291 = vshrl.u32 %v1290, 7
    %v1292 = vsub.s32 4, %v1291
    %v1293 = vrot.slane %v526, %v1292
    %1295 = vbcast.lane.b32.xlu0 %v1293, 256
    %v1296 = vpop.permute.xlu0 %1295
    %v1297 = vlaneseq
    %v1298 = vshrl.u32 %v1297, 7
    %v1299 = vsub.s32 4, %v1298
    %v1300 = vrot.slane %v532, %v1299
    %1302 = vbcast.lane.b32.xlu0 %v1300, 256
    %v1303 = vpop.permute.xlu0 %1302
    %v1304 = vlaneseq
    %v1305 = vshrl.u32 %v1304, 7
    %v1306 = vsub.s32 4, %v1305
    %v1307 = vrot.slane %v538, %v1306
    %1309 = vbcast.lane.b32.xlu0 %v1307, 256
    %v1310 = vpop.permute.xlu0 %1309
    %v1311 = vlaneseq
    %v1312 = vshrl.u32 %v1311, 7
    %v1313 = vsub.s32 4, %v1312
    %v1314 = vrot.slane %v544, %v1313
    %1316 = vbcast.lane.b32.xlu0 %v1314, 256
    %v1317 = vpop.permute.xlu0 %1316
    %s1319 = sor.u32 256, 8
    %1320 = vbcast.lane.b32.xlu0 %v1293, %s1319
    %v1321 = vpop.permute.xlu0 %1320
    %s1323 = sor.u32 256, 8
    %1324 = vbcast.lane.b32.xlu0 %v1300, %s1323
    %v1325 = vpop.permute.xlu0 %1324
    %s1327 = sor.u32 256, 8
    %1328 = vbcast.lane.b32.xlu0 %v1307, %s1327
    %v1329 = vpop.permute.xlu0 %1328
    %s1331 = sor.u32 256, 8
    %1332 = vbcast.lane.b32.xlu0 %v1314, %s1331
    %v1333 = vpop.permute.xlu0 %1332
    %v1334 = vsel %vm240, %v1296, %v1321
    %v1335 = vsel %vm240, %v1303, %v1325
    %v1336 = vsel %vm240, %v1310, %v1329
    %v1337 = vsel %vm240, %v1317, %v1333
    %s1339 = sor.u32 256, 16
    %1340 = vbcast.lane.b32.xlu0 %v1293, %s1339
    %v1341 = vpop.permute.xlu0 %1340
    %s1343 = sor.u32 256, 16
    %1344 = vbcast.lane.b32.xlu0 %v1300, %s1343
    %v1345 = vpop.permute.xlu0 %1344
    %s1347 = sor.u32 256, 16
    %1348 = vbcast.lane.b32.xlu0 %v1307, %s1347
    %v1349 = vpop.permute.xlu0 %1348
    %s1351 = sor.u32 256, 16
    %1352 = vbcast.lane.b32.xlu0 %v1314, %s1351
    %v1353 = vpop.permute.xlu0 %1352
    %s1355 = sor.u32 256, 24
    %1356 = vbcast.lane.b32.xlu0 %v1293, %s1355
    %v1357 = vpop.permute.xlu0 %1356
    %s1359 = sor.u32 256, 24
    %1360 = vbcast.lane.b32.xlu0 %v1300, %s1359
    %v1361 = vpop.permute.xlu0 %1360
    %s1363 = sor.u32 256, 24
    %1364 = vbcast.lane.b32.xlu0 %v1307, %s1363
    %v1365 = vpop.permute.xlu0 %1364
    %s1367 = sor.u32 256, 24
    %1368 = vbcast.lane.b32.xlu0 %v1314, %s1367
    %v1369 = vpop.permute.xlu0 %1368
    %v1370 = vsel %vm240, %v1341, %v1357
    %v1371 = vsel %vm240, %v1345, %v1361
    %v1372 = vsel %vm240, %v1349, %v1365
    %v1373 = vsel %vm240, %v1353, %v1369
    %v1374 = vmul.f32 %v1283, %v1230
    %v1375 = vmul.f32 %v1285, %v1231
    %v1376 = vmul.f32 %v1287, %v1232
    %v1377 = vmul.f32 %v1289, %v1233
    %v1378 = vlaneseq
    %v1379 = vshrl.u32 %v1378, 7
    %v1380 = vsub.s32 4, %v1379
    %v1381 = vrot.slane %v586, %v1380
    %v1382 = vlaneseq
    %v1383 = vshrl.u32 %v1382, 7
    %v1384 = vsub.s32 4, %v1383
    %v1385 = vrot.slane %v587, %v1384
    %v1386 = vlaneseq
    %v1387 = vshrl.u32 %v1386, 7
    %v1388 = vsub.s32 4, %v1387
    %v1389 = vrot.slane %v588, %v1388
    %v1390 = vlaneseq
    %v1391 = vshrl.u32 %v1390, 7
    %v1392 = vsub.s32 4, %v1391
    %v1393 = vrot.slane %v589, %v1392
    %v1394 = vmul.f32 %v1334, %v1381
    %v1395 = vmul.f32 %v1335, %v1385
    %v1396 = vmul.f32 %v1336, %v1389
    %v1397 = vmul.f32 %v1337, %v1393
    %v1398 = vadd.f32 %v1374, %v1394
    %v1399 = vadd.f32 %v1375, %v1395
    %v1400 = vadd.f32 %v1376, %v1396
    %v1401 = vadd.f32 %v1377, %v1397
    %v1402 = vmul.f32 %v1398, %v1370
    %v1403 = vmul.f32 %v1399, %v1371
    %v1404 = vmul.f32 %v1400, %v1372
    %v1405 = vmul.f32 %v1401, %v1373
    %v1406 = vrot.slane %v1402, 4
    %v1407 = vadd.f32 %v1402, %v1406
    %v1408 = vrot.slane %v1407, 2
    %v1409 = vadd.f32 %v1407, %v1408
    %v1410 = vrot.slane %v1409, 1
    %v1411 = vadd.f32 %v1409, %v1410
    %v1412 = vrot.slane %v1403, 4
    %v1413 = vadd.f32 %v1403, %v1412
    %v1414 = vrot.slane %v1413, 2
    %v1415 = vadd.f32 %v1413, %v1414
    %v1416 = vrot.slane %v1415, 1
    %v1417 = vadd.f32 %v1415, %v1416
    %v1418 = vrot.slane %v1404, 4
    %v1419 = vadd.f32 %v1404, %v1418
    %v1420 = vrot.slane %v1419, 2
    %v1421 = vadd.f32 %v1419, %v1420
    %v1422 = vrot.slane %v1421, 1
    %v1423 = vadd.f32 %v1421, %v1422
    %v1424 = vrot.slane %v1405, 4
    %v1425 = vadd.f32 %v1405, %v1424
    %v1426 = vrot.slane %v1425, 2
    %v1427 = vadd.f32 %v1425, %v1426
    %v1428 = vrot.slane %v1427, 1
    %v1429 = vadd.f32 %v1427, %v1428
    %v1430 = vlaneseq
    %v1431 = vshrl.u32 %v1430, 7
    %v1432 = vsub.s32 5, %v1431
    %v1433 = vrot.slane %v582, %v1432
    %v1434 = vlaneseq
    %v1435 = vshrl.u32 %v1434, 7
    %v1436 = vsub.s32 5, %v1435
    %v1437 = vrot.slane %v583, %v1436
    %v1438 = vlaneseq
    %v1439 = vshrl.u32 %v1438, 7
    %v1440 = vsub.s32 5, %v1439
    %v1441 = vrot.slane %v584, %v1440
    %v1442 = vlaneseq
    %v1443 = vshrl.u32 %v1442, 7
    %v1444 = vsub.s32 5, %v1443
    %v1445 = vrot.slane %v585, %v1444
    %v1446 = vmul.f32 %v1433, %v44
    %v1447 = vmul.f32 %v1437, %v44
    %v1448 = vmul.f32 %v1441, %v44
    %v1449 = vmul.f32 %v1445, %v44
    %v1450 = vmul.f32 %v1446, 1.442695
    %v1451 = vpow.pop %v1450
    %v1452 = vmul.f32 %v1447, 1.442695
    %v1453 = vpow.pop %v1452
    %v1454 = vmul.f32 %v1448, 1.442695
    %v1455 = vpow.pop %v1454
    %v1456 = vmul.f32 %v1449, 1.442695
    %v1457 = vpow.pop %v1456
    %v1458 = vlaneseq
    %v1459 = vshrl.u32 %v1458, 7
    %v1460 = vsub.s32 5, %v1459
    %v1461 = vrot.slane %v526, %v1460
    %1463 = vbcast.lane.b32.xlu0 %v1461, 256
    %v1464 = vpop.permute.xlu0 %1463
    %v1465 = vlaneseq
    %v1466 = vshrl.u32 %v1465, 7
    %v1467 = vsub.s32 5, %v1466
    %v1468 = vrot.slane %v532, %v1467
    %1470 = vbcast.lane.b32.xlu0 %v1468, 256
    %v1471 = vpop.permute.xlu0 %1470
    %v1472 = vlaneseq
    %v1473 = vshrl.u32 %v1472, 7
    %v1474 = vsub.s32 5, %v1473
    %v1475 = vrot.slane %v538, %v1474
    %1477 = vbcast.lane.b32.xlu0 %v1475, 256
    %v1478 = vpop.permute.xlu0 %1477
    %v1479 = vlaneseq
    %v1480 = vshrl.u32 %v1479, 7
    %v1481 = vsub.s32 5, %v1480
    %v1482 = vrot.slane %v544, %v1481
    %1484 = vbcast.lane.b32.xlu0 %v1482, 256
    %v1485 = vpop.permute.xlu0 %1484
    %s1487 = sor.u32 256, 8
    %1488 = vbcast.lane.b32.xlu0 %v1461, %s1487
    %v1489 = vpop.permute.xlu0 %1488
    %s1491 = sor.u32 256, 8
    %1492 = vbcast.lane.b32.xlu0 %v1468, %s1491
    %v1493 = vpop.permute.xlu0 %1492
    %s1495 = sor.u32 256, 8
    %1496 = vbcast.lane.b32.xlu0 %v1475, %s1495
    %v1497 = vpop.permute.xlu0 %1496
    %s1499 = sor.u32 256, 8
    %1500 = vbcast.lane.b32.xlu0 %v1482, %s1499
    %v1501 = vpop.permute.xlu0 %1500
    %v1502 = vsel %vm240, %v1464, %v1489
    %v1503 = vsel %vm240, %v1471, %v1493
    %v1504 = vsel %vm240, %v1478, %v1497
    %v1505 = vsel %vm240, %v1485, %v1501
    %s1507 = sor.u32 256, 16
    %1508 = vbcast.lane.b32.xlu0 %v1461, %s1507
    %v1509 = vpop.permute.xlu0 %1508
    %s1511 = sor.u32 256, 16
    %1512 = vbcast.lane.b32.xlu0 %v1468, %s1511
    %v1513 = vpop.permute.xlu0 %1512
    %s1515 = sor.u32 256, 16
    %1516 = vbcast.lane.b32.xlu0 %v1475, %s1515
    %v1517 = vpop.permute.xlu0 %1516
    %s1519 = sor.u32 256, 16
    %1520 = vbcast.lane.b32.xlu0 %v1482, %s1519
    %v1521 = vpop.permute.xlu0 %1520
    %s1523 = sor.u32 256, 24
    %1524 = vbcast.lane.b32.xlu0 %v1461, %s1523
    %v1525 = vpop.permute.xlu0 %1524
    %s1527 = sor.u32 256, 24
    %1528 = vbcast.lane.b32.xlu0 %v1468, %s1527
    %v1529 = vpop.permute.xlu0 %1528
    %s1531 = sor.u32 256, 24
    %1532 = vbcast.lane.b32.xlu0 %v1475, %s1531
    %v1533 = vpop.permute.xlu0 %1532
    %s1535 = sor.u32 256, 24
    %1536 = vbcast.lane.b32.xlu0 %v1482, %s1535
    %v1537 = vpop.permute.xlu0 %1536
    %v1538 = vsel %vm240, %v1509, %v1525
    %v1539 = vsel %vm240, %v1513, %v1529
    %v1540 = vsel %vm240, %v1517, %v1533
    %v1541 = vsel %vm240, %v1521, %v1537
    %v1542 = vmul.f32 %v1451, %v1398
    %v1543 = vmul.f32 %v1453, %v1399
    %v1544 = vmul.f32 %v1455, %v1400
    %v1545 = vmul.f32 %v1457, %v1401
    %v1546 = vlaneseq
    %v1547 = vshrl.u32 %v1546, 7
    %v1548 = vsub.s32 5, %v1547
    %v1549 = vrot.slane %v586, %v1548
    %v1550 = vlaneseq
    %v1551 = vshrl.u32 %v1550, 7
    %v1552 = vsub.s32 5, %v1551
    %v1553 = vrot.slane %v587, %v1552
    %v1554 = vlaneseq
    %v1555 = vshrl.u32 %v1554, 7
    %v1556 = vsub.s32 5, %v1555
    %v1557 = vrot.slane %v588, %v1556
    %v1558 = vlaneseq
    %v1559 = vshrl.u32 %v1558, 7
    %v1560 = vsub.s32 5, %v1559
    %v1561 = vrot.slane %v589, %v1560
    %v1562 = vmul.f32 %v1502, %v1549
    %v1563 = vmul.f32 %v1503, %v1553
    %v1564 = vmul.f32 %v1504, %v1557
    %v1565 = vmul.f32 %v1505, %v1561
    %v1566 = vadd.f32 %v1542, %v1562
    %v1567 = vadd.f32 %v1543, %v1563
    %v1568 = vadd.f32 %v1544, %v1564
    %v1569 = vadd.f32 %v1545, %v1565
    %v1570 = vmul.f32 %v1566, %v1538
    %v1571 = vmul.f32 %v1567, %v1539
    %v1572 = vmul.f32 %v1568, %v1540
    %v1573 = vmul.f32 %v1569, %v1541
    %v1574 = vrot.slane %v1570, 4
    %v1575 = vadd.f32 %v1570, %v1574
    %v1576 = vrot.slane %v1575, 2
    %v1577 = vadd.f32 %v1575, %v1576
    %v1578 = vrot.slane %v1577, 1
    %v1579 = vadd.f32 %v1577, %v1578
    %v1580 = vrot.slane %v1571, 4
    %v1581 = vadd.f32 %v1571, %v1580
    %v1582 = vrot.slane %v1581, 2
    %v1583 = vadd.f32 %v1581, %v1582
    %v1584 = vrot.slane %v1583, 1
    %v1585 = vadd.f32 %v1583, %v1584
    %v1586 = vrot.slane %v1572, 4
    %v1587 = vadd.f32 %v1572, %v1586
    %v1588 = vrot.slane %v1587, 2
    %v1589 = vadd.f32 %v1587, %v1588
    %v1590 = vrot.slane %v1589, 1
    %v1591 = vadd.f32 %v1589, %v1590
    %v1592 = vrot.slane %v1573, 4
    %v1593 = vadd.f32 %v1573, %v1592
    %v1594 = vrot.slane %v1593, 2
    %v1595 = vadd.f32 %v1593, %v1594
    %v1596 = vrot.slane %v1595, 1
    %v1597 = vadd.f32 %v1595, %v1596
    %v1598 = vlaneseq
    %v1599 = vshrl.u32 %v1598, 7
    %v1600 = vsub.s32 6, %v1599
    %v1601 = vrot.slane %v582, %v1600
    %v1602 = vlaneseq
    %v1603 = vshrl.u32 %v1602, 7
    %v1604 = vsub.s32 6, %v1603
    %v1605 = vrot.slane %v583, %v1604
    %v1606 = vlaneseq
    %v1607 = vshrl.u32 %v1606, 7
    %v1608 = vsub.s32 6, %v1607
    %v1609 = vrot.slane %v584, %v1608
    %v1610 = vlaneseq
    %v1611 = vshrl.u32 %v1610, 7
    %v1612 = vsub.s32 6, %v1611
    %v1613 = vrot.slane %v585, %v1612
    %v1614 = vmul.f32 %v1601, %v44
    %v1615 = vmul.f32 %v1605, %v44
    %v1616 = vmul.f32 %v1609, %v44
    %v1617 = vmul.f32 %v1613, %v44
    %v1618 = vmul.f32 %v1614, 1.442695
    %v1619 = vpow.pop %v1618
    %v1620 = vmul.f32 %v1615, 1.442695
    %v1621 = vpow.pop %v1620
    %v1622 = vmul.f32 %v1616, 1.442695
    %v1623 = vpow.pop %v1622
    %v1624 = vmul.f32 %v1617, 1.442695
    %v1625 = vpow.pop %v1624
    %v1626 = vlaneseq
    %v1627 = vshrl.u32 %v1626, 7
    %v1628 = vsub.s32 6, %v1627
    %v1629 = vrot.slane %v526, %v1628
    %1631 = vbcast.lane.b32.xlu0 %v1629, 256
    %v1632 = vpop.permute.xlu0 %1631
    %v1633 = vlaneseq
    %v1634 = vshrl.u32 %v1633, 7
    %v1635 = vsub.s32 6, %v1634
    %v1636 = vrot.slane %v532, %v1635
    %1638 = vbcast.lane.b32.xlu0 %v1636, 256
    %v1639 = vpop.permute.xlu0 %1638
    %v1640 = vlaneseq
    %v1641 = vshrl.u32 %v1640, 7
    %v1642 = vsub.s32 6, %v1641
    %v1643 = vrot.slane %v538, %v1642
    %1645 = vbcast.lane.b32.xlu0 %v1643, 256
    %v1646 = vpop.permute.xlu0 %1645
    %v1647 = vlaneseq
    %v1648 = vshrl.u32 %v1647, 7
    %v1649 = vsub.s32 6, %v1648
    %v1650 = vrot.slane %v544, %v1649
    %1652 = vbcast.lane.b32.xlu0 %v1650, 256
    %v1653 = vpop.permute.xlu0 %1652
    %s1655 = sor.u32 256, 8
    %1656 = vbcast.lane.b32.xlu0 %v1629, %s1655
    %v1657 = vpop.permute.xlu0 %1656
    %s1659 = sor.u32 256, 8
    %1660 = vbcast.lane.b32.xlu0 %v1636, %s1659
    %v1661 = vpop.permute.xlu0 %1660
    %s1663 = sor.u32 256, 8
    %1664 = vbcast.lane.b32.xlu0 %v1643, %s1663
    %v1665 = vpop.permute.xlu0 %1664
    %s1667 = sor.u32 256, 8
    %1668 = vbcast.lane.b32.xlu0 %v1650, %s1667
    %v1669 = vpop.permute.xlu0 %1668
    %v1670 = vsel %vm240, %v1632, %v1657
    %v1671 = vsel %vm240, %v1639, %v1661
    %v1672 = vsel %vm240, %v1646, %v1665
    %v1673 = vsel %vm240, %v1653, %v1669
    %s1675 = sor.u32 256, 16
    %1676 = vbcast.lane.b32.xlu0 %v1629, %s1675
    %v1677 = vpop.permute.xlu0 %1676
    %s1679 = sor.u32 256, 16
    %1680 = vbcast.lane.b32.xlu0 %v1636, %s1679
    %v1681 = vpop.permute.xlu0 %1680
    %s1683 = sor.u32 256, 16
    %1684 = vbcast.lane.b32.xlu0 %v1643, %s1683
    %v1685 = vpop.permute.xlu0 %1684
    %s1687 = sor.u32 256, 16
    %1688 = vbcast.lane.b32.xlu0 %v1650, %s1687
    %v1689 = vpop.permute.xlu0 %1688
    %s1691 = sor.u32 256, 24
    %1692 = vbcast.lane.b32.xlu0 %v1629, %s1691
    %v1693 = vpop.permute.xlu0 %1692
    %s1695 = sor.u32 256, 24
    %1696 = vbcast.lane.b32.xlu0 %v1636, %s1695
    %v1697 = vpop.permute.xlu0 %1696
    %s1699 = sor.u32 256, 24
    %1700 = vbcast.lane.b32.xlu0 %v1643, %s1699
    %v1701 = vpop.permute.xlu0 %1700
    %s1703 = sor.u32 256, 24
    %1704 = vbcast.lane.b32.xlu0 %v1650, %s1703
    %v1705 = vpop.permute.xlu0 %1704
    %v1706 = vsel %vm240, %v1677, %v1693
    %v1707 = vsel %vm240, %v1681, %v1697
    %v1708 = vsel %vm240, %v1685, %v1701
    %v1709 = vsel %vm240, %v1689, %v1705
    %v1710 = vmul.f32 %v1619, %v1566
    %v1711 = vmul.f32 %v1621, %v1567
    %v1712 = vmul.f32 %v1623, %v1568
    %v1713 = vmul.f32 %v1625, %v1569
    %v1714 = vlaneseq
    %v1715 = vshrl.u32 %v1714, 7
    %v1716 = vsub.s32 6, %v1715
    %v1717 = vrot.slane %v586, %v1716
    %v1718 = vlaneseq
    %v1719 = vshrl.u32 %v1718, 7
    %v1720 = vsub.s32 6, %v1719
    %v1721 = vrot.slane %v587, %v1720
    %v1722 = vlaneseq
    %v1723 = vshrl.u32 %v1722, 7
    %v1724 = vsub.s32 6, %v1723
    %v1725 = vrot.slane %v588, %v1724
    %v1726 = vlaneseq
    %v1727 = vshrl.u32 %v1726, 7
    %v1728 = vsub.s32 6, %v1727
    %v1729 = vrot.slane %v589, %v1728
    %v1730 = vmul.f32 %v1670, %v1717
    %v1731 = vmul.f32 %v1671, %v1721
    %v1732 = vmul.f32 %v1672, %v1725
    %v1733 = vmul.f32 %v1673, %v1729
    %v1734 = vadd.f32 %v1710, %v1730
    %v1735 = vadd.f32 %v1711, %v1731
    %v1736 = vadd.f32 %v1712, %v1732
    %v1737 = vadd.f32 %v1713, %v1733
    %v1738 = vmul.f32 %v1734, %v1706
    %v1739 = vmul.f32 %v1735, %v1707
    %v1740 = vmul.f32 %v1736, %v1708
    %v1741 = vmul.f32 %v1737, %v1709
    %v1742 = vrot.slane %v1738, 4
    %v1743 = vadd.f32 %v1738, %v1742
    %v1744 = vrot.slane %v1743, 2
    %v1745 = vadd.f32 %v1743, %v1744
    %v1746 = vrot.slane %v1745, 1
    %v1747 = vadd.f32 %v1745, %v1746
    %v1748 = vrot.slane %v1739, 4
    %v1749 = vadd.f32 %v1739, %v1748
    %v1750 = vrot.slane %v1749, 2
    %v1751 = vadd.f32 %v1749, %v1750
    %v1752 = vrot.slane %v1751, 1
    %v1753 = vadd.f32 %v1751, %v1752
    %v1754 = vrot.slane %v1740, 4
    %v1755 = vadd.f32 %v1740, %v1754
    %v1756 = vrot.slane %v1755, 2
    %v1757 = vadd.f32 %v1755, %v1756
    %v1758 = vrot.slane %v1757, 1
    %v1759 = vadd.f32 %v1757, %v1758
    %v1760 = vrot.slane %v1741, 4
    %v1761 = vadd.f32 %v1741, %v1760
    %v1762 = vrot.slane %v1761, 2
    %v1763 = vadd.f32 %v1761, %v1762
    %v1764 = vrot.slane %v1763, 1
    %v1765 = vadd.f32 %v1763, %v1764
    %v1766 = vlaneseq
    %v1767 = vshrl.u32 %v1766, 7
    %v1768 = vsub.s32 7, %v1767
    %v1769 = vrot.slane %v582, %v1768
    %v1770 = vlaneseq
    %v1771 = vshrl.u32 %v1770, 7
    %v1772 = vsub.s32 7, %v1771
    %v1773 = vrot.slane %v583, %v1772
    %v1774 = vlaneseq
    %v1775 = vshrl.u32 %v1774, 7
    %v1776 = vsub.s32 7, %v1775
    %v1777 = vrot.slane %v584, %v1776
    %v1778 = vlaneseq
    %v1779 = vshrl.u32 %v1778, 7
    %v1780 = vsub.s32 7, %v1779
    %v1781 = vrot.slane %v585, %v1780
    %v1782 = vmul.f32 %v1769, %v44
    %v1783 = vmul.f32 %v1773, %v44
    %v1784 = vmul.f32 %v1777, %v44
    %v1785 = vmul.f32 %v1781, %v44
    %v1786 = vmul.f32 %v1782, 1.442695
    %v1787 = vpow.pop %v1786
    %v1788 = vmul.f32 %v1783, 1.442695
    %v1789 = vpow.pop %v1788
    %v1790 = vmul.f32 %v1784, 1.442695
    %v1791 = vpow.pop %v1790
    %v1792 = vmul.f32 %v1785, 1.442695
    %v1793 = vpow.pop %v1792
    %v1794 = vlaneseq
    %v1795 = vshrl.u32 %v1794, 7
    %v1796 = vsub.s32 7, %v1795
    %v1797 = vrot.slane %v526, %v1796
    %1799 = vbcast.lane.b32.xlu0 %v1797, 256
    %v1800 = vpop.permute.xlu0 %1799
    %v1801 = vlaneseq
    %v1802 = vshrl.u32 %v1801, 7
    %v1803 = vsub.s32 7, %v1802
    %v1804 = vrot.slane %v532, %v1803
    %1806 = vbcast.lane.b32.xlu0 %v1804, 256
    %v1807 = vpop.permute.xlu0 %1806
    %v1808 = vlaneseq
    %v1809 = vshrl.u32 %v1808, 7
    %v1810 = vsub.s32 7, %v1809
    %v1811 = vrot.slane %v538, %v1810
    %1813 = vbcast.lane.b32.xlu0 %v1811, 256
    %v1814 = vpop.permute.xlu0 %1813
    %v1815 = vlaneseq
    %v1816 = vshrl.u32 %v1815, 7
    %v1817 = vsub.s32 7, %v1816
    %v1818 = vrot.slane %v544, %v1817
    %1820 = vbcast.lane.b32.xlu0 %v1818, 256
    %v1821 = vpop.permute.xlu0 %1820
    %s1823 = sor.u32 256, 8
    %1824 = vbcast.lane.b32.xlu0 %v1797, %s1823
    %v1825 = vpop.permute.xlu0 %1824
    %s1827 = sor.u32 256, 8
    %1828 = vbcast.lane.b32.xlu0 %v1804, %s1827
    %v1829 = vpop.permute.xlu0 %1828
    %s1831 = sor.u32 256, 8
    %1832 = vbcast.lane.b32.xlu0 %v1811, %s1831
    %v1833 = vpop.permute.xlu0 %1832
    %s1835 = sor.u32 256, 8
    %1836 = vbcast.lane.b32.xlu0 %v1818, %s1835
    %v1837 = vpop.permute.xlu0 %1836
    %v1838 = vsel %vm240, %v1800, %v1825
    %v1839 = vsel %vm240, %v1807, %v1829
    %v1840 = vsel %vm240, %v1814, %v1833
    %v1841 = vsel %vm240, %v1821, %v1837
    %s1843 = sor.u32 256, 16
    %1844 = vbcast.lane.b32.xlu0 %v1797, %s1843
    %v1845 = vpop.permute.xlu0 %1844
    %s1847 = sor.u32 256, 16
    %1848 = vbcast.lane.b32.xlu0 %v1804, %s1847
    %v1849 = vpop.permute.xlu0 %1848
    %s1851 = sor.u32 256, 16
    %1852 = vbcast.lane.b32.xlu0 %v1811, %s1851
    %v1853 = vpop.permute.xlu0 %1852
    %s1855 = sor.u32 256, 16
    %1856 = vbcast.lane.b32.xlu0 %v1818, %s1855
    %v1857 = vpop.permute.xlu0 %1856
    %s1859 = sor.u32 256, 24
    %1860 = vbcast.lane.b32.xlu0 %v1797, %s1859
    %v1861 = vpop.permute.xlu0 %1860
    %s1863 = sor.u32 256, 24
    %1864 = vbcast.lane.b32.xlu0 %v1804, %s1863
    %v1865 = vpop.permute.xlu0 %1864
    %s1867 = sor.u32 256, 24
    %1868 = vbcast.lane.b32.xlu0 %v1811, %s1867
    %v1869 = vpop.permute.xlu0 %1868
    %s1871 = sor.u32 256, 24
    %1872 = vbcast.lane.b32.xlu0 %v1818, %s1871
    %v1873 = vpop.permute.xlu0 %1872
    %v1874 = vsel %vm240, %v1845, %v1861
    %v1875 = vsel %vm240, %v1849, %v1865
    %v1876 = vsel %vm240, %v1853, %v1869
    %v1877 = vsel %vm240, %v1857, %v1873
    %v1878 = vmul.f32 %v1787, %v1734
    %v1879 = vmul.f32 %v1789, %v1735
    %v1880 = vmul.f32 %v1791, %v1736
    %v1881 = vmul.f32 %v1793, %v1737
    %v1882 = vlaneseq
    %v1883 = vshrl.u32 %v1882, 7
    %v1884 = vsub.s32 7, %v1883
    %v1885 = vrot.slane %v586, %v1884
    %v1886 = vlaneseq
    %v1887 = vshrl.u32 %v1886, 7
    %v1888 = vsub.s32 7, %v1887
    %v1889 = vrot.slane %v587, %v1888
    %v1890 = vlaneseq
    %v1891 = vshrl.u32 %v1890, 7
    %v1892 = vsub.s32 7, %v1891
    %v1893 = vrot.slane %v588, %v1892
    %v1894 = vlaneseq
    %v1895 = vshrl.u32 %v1894, 7
    %v1896 = vsub.s32 7, %v1895
    %v1897 = vrot.slane %v589, %v1896
    %v1898 = vmul.f32 %v1838, %v1885
    %v1899 = vmul.f32 %v1839, %v1889
    %v1900 = vmul.f32 %v1840, %v1893
    %v1901 = vmul.f32 %v1841, %v1897
    %v1902 = vadd.f32 %v1878, %v1898
    %v1903 = vadd.f32 %v1879, %v1899
    %v1904 = vadd.f32 %v1880, %v1900
    %v1905 = vadd.f32 %v1881, %v1901
    %v1906 = vmul.f32 %v1902, %v1874
    %v1907 = vmul.f32 %v1903, %v1875
    %v1908 = vmul.f32 %v1904, %v1876
    %v1909 = vmul.f32 %v1905, %v1877
    %v1910 = vrot.slane %v1906, 4
    %v1911 = vadd.f32 %v1906, %v1910
    %v1912 = vrot.slane %v1911, 2
    %v1913 = vadd.f32 %v1911, %v1912
    %v1914 = vrot.slane %v1913, 1
    %v1915 = vadd.f32 %v1913, %v1914
    %v1916 = vrot.slane %v1907, 4
    %v1917 = vadd.f32 %v1907, %v1916
    %v1918 = vrot.slane %v1917, 2
    %v1919 = vadd.f32 %v1917, %v1918
    %v1920 = vrot.slane %v1919, 1
    %v1921 = vadd.f32 %v1919, %v1920
    %v1922 = vrot.slane %v1908, 4
    %v1923 = vadd.f32 %v1908, %v1922
    %v1924 = vrot.slane %v1923, 2
    %v1925 = vadd.f32 %v1923, %v1924
    %v1926 = vrot.slane %v1925, 1
    %v1927 = vadd.f32 %v1925, %v1926
    %v1928 = vrot.slane %v1909, 4
    %v1929 = vadd.f32 %v1909, %v1928
    %v1930 = vrot.slane %v1929, 2
    %v1931 = vadd.f32 %v1929, %v1930
    %v1932 = vrot.slane %v1931, 1
    %v1933 = vadd.f32 %v1931, %v1932
    %v1934 = vsel %vm189, %v739, %v907
    %v1935 = vsel %vm189, %v745, %v913
    %v1936 = vsel %vm189, %v751, %v919
    %v1937 = vsel %vm189, %v757, %v925
    %v1938 = vsel %vm194, %v1934, %v1075
    %v1939 = vsel %vm194, %v1935, %v1081
    %v1940 = vsel %vm194, %v1936, %v1087
    %v1941 = vsel %vm194, %v1937, %v1093
    %v1942 = vsel %vm199, %v1938, %v1243
    %v1943 = vsel %vm199, %v1939, %v1249
    %v1944 = vsel %vm199, %v1940, %v1255
    %v1945 = vsel %vm199, %v1941, %v1261
    %v1946 = vsel %vm204, %v1942, %v1411
    %v1947 = vsel %vm204, %v1943, %v1417
    %v1948 = vsel %vm204, %v1944, %v1423
    %v1949 = vsel %vm204, %v1945, %v1429
    %v1950 = vsel %vm209, %v1946, %v1579
    %v1951 = vsel %vm209, %v1947, %v1585
    %v1952 = vsel %vm209, %v1948, %v1591
    %v1953 = vsel %vm209, %v1949, %v1597
    %v1954 = vsel %vm214, %v1950, %v1747
    %v1955 = vsel %vm214, %v1951, %v1753
    %v1956 = vsel %vm214, %v1952, %v1759
    %v1957 = vsel %vm214, %v1953, %v1765
    %v1958 = vsel %vm219, %v1954, %v1915
    %v1959 = vsel %vm219, %v1955, %v1921
    %v1960 = vsel %vm219, %v1956, %v1927
    %v1961 = vsel %vm219, %v1957, %v1933
    %v1962 = vlaneseq
    %v1963 = vshrl.u32 %v1962, 7
    %v1964 = vsub.s32 2, %v1963
    %v1965 = vrot.slane %v46, %v1964
    %v1966 = vmul.f32 %v1965, %v421
    %v1967 = vmul.f32 %v1965, %v422
    %v1968 = vmul.f32 %v1965, %v423
    %v1969 = vmul.f32 %v1965, %v424
    %v1970 = vadd.f32 %v1958, %v1966
    %v1971 = vadd.f32 %v1959, %v1967
    %v1972 = vadd.f32 %v1960, %v1968
    %v1973 = vadd.f32 %v1961, %v1969
    %v1978 = vrot.slane %v1970, 7
    %v1979 = vrot.slane %v1971, 7
    %v1980 = vrot.slane %v1972, 7
    %v1981 = vrot.slane %v1973, 7
    %v1986 = vrot.slane %v1970, 5
    %v1987 = vrot.slane %v1971, 5
    %v1988 = vrot.slane %v1972, 5
    %v1989 = vrot.slane %v1973, 5
    %v1994 = vrot.slane %v1970, 3
    %v1995 = vrot.slane %v1971, 3
    %v1996 = vrot.slane %v1972, 3
    %v1997 = vrot.slane %v1973, 3
    %v2002 = vrot.slane %v1970, 1
    %v2003 = vrot.slane %v1971, 1
    %v2004 = vrot.slane %v1972, 1
    %v2005 = vrot.slane %v1973, 1
    %v2010 = vsel %vm189, %v1978, %v1986
    %v2011 = vsel %vm189, %v1979, %v1987
    %v2012 = vsel %vm189, %v1980, %v1988
    %v2013 = vsel %vm189, %v1981, %v1989
    %v2014 = vsel %vm194, %v2010, %v1994
    %v2015 = vsel %vm194, %v2011, %v1995
    %v2016 = vsel %vm194, %v2012, %v1996
    %v2017 = vsel %vm194, %v2013, %v1997
    %v2018 = vsel %vm199, %v2014, %v2002
    %v2019 = vsel %vm199, %v2015, %v2003
    %v2020 = vsel %vm199, %v2016, %v2004
    %v2021 = vsel %vm199, %v2017, %v2005
    %v2022 = vsel %vm204, %v2018, %v1978
    %v2023 = vsel %vm204, %v2019, %v1979
    %v2024 = vsel %vm204, %v2020, %v1980
    %v2025 = vsel %vm204, %v2021, %v1981
    %v2026 = vsel %vm209, %v2022, %v1986
    %v2027 = vsel %vm209, %v2023, %v1987
    %v2028 = vsel %vm209, %v2024, %v1988
    %v2029 = vsel %vm209, %v2025, %v1989
    %v2030 = vsel %vm214, %v2026, %v1994
    %v2031 = vsel %vm214, %v2027, %v1995
    %v2032 = vsel %vm214, %v2028, %v1996
    %v2033 = vsel %vm214, %v2029, %v1997
    %v2034 = vsel %vm219, %v2030, %v2002
    %v2035 = vsel %vm219, %v2031, %v2003
    %v2036 = vsel %vm219, %v2032, %v2004
    %v2037 = vsel %vm219, %v2033, %v2005
    %2042 = vrot.lane.b32.xlu0 %v2034, 64
    %v2043 = vpop.permute.xlu0 %2042
    %2044 = vrot.lane.b32.xlu0 %v2035, 64
    %v2045 = vpop.permute.xlu0 %2044
    %2046 = vrot.lane.b32.xlu0 %v2036, 64
    %v2047 = vpop.permute.xlu0 %2046
    %2048 = vrot.lane.b32.xlu0 %v2037, 64
    %v2049 = vpop.permute.xlu0 %2048
    %v2054 = vadd.f32 %v1970, %v2043
    %v2055 = vadd.f32 %v1971, %v2045
    %v2056 = vadd.f32 %v1972, %v2047
    %v2057 = vadd.f32 %v1973, %v2049
    %v2058 = vsub.f32 0.0, %v135
    %v2059 = vsub.f32 0.0, %v140
    %v2060 = vsub.f32 0.0, %v145
    %v2061 = vsub.f32 0.0, %v150
    %v2062 = vmul.f32 %v2058, 1.442695
    %v2063 = vpow.pop %v2062
    %v2064 = vmul.f32 %v2059, 1.442695
    %v2065 = vpow.pop %v2064
    %v2066 = vmul.f32 %v2060, 1.442695
    %v2067 = vpow.pop %v2066
    %v2068 = vmul.f32 %v2061, 1.442695
    %v2069 = vpow.pop %v2068
    %v2070 = vadd.f32 %v2063, 1.0
    %v2071 = vadd.f32 %v2065, 1.0
    %v2072 = vadd.f32 %v2067, 1.0
    %v2073 = vadd.f32 %v2069, 1.0
    %v2074 = vrcp.pop %v2070
    %v2075 = vmul.f32 1.0, %v2074
    %v2076 = vrcp.pop %v2071
    %v2077 = vmul.f32 1.0, %v2076
    %v2078 = vrcp.pop %v2072
    %v2079 = vmul.f32 1.0, %v2078
    %v2080 = vrcp.pop %v2073
    %v2081 = vmul.f32 1.0, %v2080
    %v2082 = vmul.f32 %v135, %v2075
    %v2083 = vmul.f32 %v140, %v2077
    %v2084 = vmul.f32 %v145, %v2079
    %v2085 = vmul.f32 %v150, %v2081
    %2090 = vrot.lane.b32.xlu0 %v2082, 64
    %v2091 = vpop.permute.xlu0 %2090
    %2092 = vrot.lane.b32.xlu0 %v2083, 64
    %v2093 = vpop.permute.xlu0 %2092
    %2094 = vrot.lane.b32.xlu0 %v2084, 64
    %v2095 = vpop.permute.xlu0 %2094
    %2096 = vrot.lane.b32.xlu0 %v2085, 64
    %v2097 = vpop.permute.xlu0 %2096
    %v2102 = vmul.f32 %v2054, %v2091
    %v2103 = vmul.f32 %v2055, %v2093
    %v2104 = vmul.f32 %v2056, %v2095
    %v2105 = vmul.f32 %v2057, %v2097
    %v2106 = vld [vmem:[%s4] sm:$0xff]
    %v2107 = vld [vmem:[%s4 + $0x8] sm:$0xff]
    %v2108 = vld [vmem:[%s4 + $0x10] sm:$0xff]
    %v2109 = vld [vmem:[%s4 + $0x18] sm:$0xff]
    %v2110 = vld [vmem:[%s4 + $0x20] sm:$0xff]
    %v2111 = vld [vmem:[%s4 + $0x28] sm:$0xff]
    %v2112 = vld [vmem:[%s4 + $0x30] sm:$0xff]
    %v2113 = vld [vmem:[%s4 + $0x38] sm:$0xff]
    %v2115 = vsel %vm240, %v2102, 0
    %v2118 = vsel %vm240, %v2103, 0
    %v2121 = vsel %vm240, %v2104, 0
    %v2124 = vsel %vm240, %v2105, 0
    %2126 = vmatprep.subr.mxu0 0.0
    %2127 = vmatpush1.msra.mxu0 %v2106
    %2128 = vmatprep.subr.mxu0 0.0
    %2129 = vmatpush1.msra.mxu0 %v2107
    %2130 = vmatprep.subr.mxu0 0.0
    %2131 = vmatpush1.msra.mxu0 %v2108
    %2132 = vmatprep.subr.mxu0 0.0
    %2133 = vmatpush1.msra.mxu0 %v2109
    %2134 = vmatprep.subr.mxu0 0.0
    %2135 = vmatpush1.msra.mxu0 %v2110
    %2136 = vmatprep.subr.mxu0 0.0
    %2137 = vmatpush1.msra.mxu0 %v2111
    %2138 = vmatprep.subr.mxu0 0.0
    %2139 = vmatpush1.msra.mxu0 %v2112
    %2140 = vmatprep.subr.mxu0 0.0
    %2141 = vmatpush1.msra.mxu0 %v2113
    %2142 = vmatprep.subr.mxu0 0.0
    %2143 = vmatpush1.msra.mxu0 0.0
    %2144 = vmatprep.subr.mxu0 0.0
    %2145 = vmatpush1.msra.mxu0 0.0
    %2146 = vmatprep.subr.mxu0 0.0
    %2147 = vmatpush1.msra.mxu0 0.0
    %2148 = vmatprep.subr.mxu0 0.0
    %2149 = vmatpush1.msra.mxu0 0.0
    %2150 = vmatprep.subr.mxu0 0.0
    %2151 = vmatpush1.msra.mxu0 0.0
    %2152 = vmatprep.subr.mxu0 0.0
    %2153 = vmatpush1.msra.mxu0 0.0
    %2154 = vmatprep.subr.mxu0 0.0
    %2155 = vmatpush1.msra.mxu0 0.0
    %2156 = vmatprep.subr.mxu0 0.0
    %2157 = vmatpush1.msra.mxu0 0.0
    %2158 = vmatprep.subr.mxu0 0.0
    %2159 = vmatpush1.msra.mxu0 0.0
    %2160 = vmatprep.subr.mxu0 0.0
    %2161 = vmatpush1.msra.mxu0 0.0
    %2162 = vmatprep.subr.mxu0 0.0
    %2163 = vmatpush1.msra.mxu0 0.0
    %2164 = vmatprep.subr.mxu0 0.0
    %2165 = vmatpush1.msra.mxu0 0.0
    %2166 = vmatprep.subr.mxu0 0.0
    %2167 = vmatpush1.msra.mxu0 0.0
    %2168 = vmatprep.subr.mxu0 0.0
    %2169 = vmatpush1.msra.mxu0 0.0
    %2170 = vmatprep.subr.mxu0 0.0
    %2171 = vmatpush1.msra.mxu0 0.0
    %2172 = vmatprep.subr.mxu0 0.0
    %2173 = vmatpush1.msra.mxu0 0.0
    %2174 = vmatprep.subr.mxu0 0.0
    %2175 = vmatpush1.msra.mxu0 0.0
    %2176 = vmatprep.subr.mxu0 0.0
    %2177 = vmatpush1.msra.mxu0 0.0
    %2178 = vmatprep.subr.mxu0 0.0
    %2179 = vmatpush1.msra.mxu0 0.0
    %2180 = vmatprep.subr.mxu0 0.0
    %2181 = vmatpush1.msra.mxu0 0.0
    %2182 = vmatprep.subr.mxu0 0.0
    %2183 = vmatpush1.msra.mxu0 0.0
    %2184 = vmatprep.subr.mxu0 0.0
    %2185 = vmatpush1.msra.mxu0 0.0
    %2186 = vmatprep.subr.mxu0 0.0
    %2187 = vmatpush1.msra.mxu0 0.0
    %2188 = vmatprep.subr.mxu0 0.0
    %2189 = vmatpush1.msra.mxu0 0.0
    %2190 = vmatprep.mubr.f32.mxu0 0.0
    %2191 = vmatmul.mubr.f32.gmra.mrb[0].mxu0 %v2115
    %v2192 = vpop.f32.mrb[0].mxu0
    %v2193 = vadd.f32 0.0, %v2192
    %v2194 = vpop.f32.mrb[0].mxu0
    %2195 = vmatprep.mubr.f32.mxu0 0.0
    %2196 = vmatmul.mubr.f32.gmra.mrb[0].mxu0 %v2118
    %v2197 = vpop.f32.mrb[0].mxu0
    %v2198 = vadd.f32 0.0, %v2197
    %v2199 = vpop.f32.mrb[0].mxu0
    %2200 = vmatprep.mubr.f32.mxu0 0.0
    %2201 = vmatmul.mubr.f32.gmra.mrb[0].mxu0 %v2121
    %v2202 = vpop.f32.mrb[0].mxu0
    %v2203 = vadd.f32 0.0, %v2202
    %v2204 = vpop.f32.mrb[0].mxu0
    %2205 = vmatprep.mubr.f32.mxu0 0.0
    %2206 = vmatmul.mubr.f32.gmra.mrb[0].mxu0 %v2124
    %v2207 = vpop.f32.mrb[0].mxu0
    %v2208 = vadd.f32 0.0, %v2207
    %v2209 = vpop.f32.mrb[0].mxu0
    %2210 = vdwg.mxu0
    %v2211 = vsel %vm55, %v2193, 0.0
    %2212 = vadd.xlane.f32.xlu0 %v2211
    %v2213 = vpop.xlane.xlu0 %2212
    %v2214 = vsel %vm55, %v2198, 0.0
    %2215 = vadd.xlane.f32.xlu0 %v2214
    %v2216 = vpop.xlane.xlu0 %2215
    %v2217 = vsel %vm55, %v2203, 0.0
    %2218 = vadd.xlane.f32.xlu0 %v2217
    %v2219 = vpop.xlane.xlu0 %2218
    %v2220 = vsel %vm55, %v2208, 0.0
    %2221 = vadd.xlane.f32.xlu0 %v2220
    %v2222 = vpop.xlane.xlu0 %2221
    %v2223 = vrcp.pop 32.0
    %v2224 = vmul.f32 %v2213, %v2223
    %v2225 = vmul.f32 %v2216, %v2223
    %v2226 = vmul.f32 %v2219, %v2223
    %v2227 = vmul.f32 %v2222, %v2223
    %v2228 = vsub.f32 %v2193, %v2224
    %v2229 = vsub.f32 %v2198, %v2225
    %v2230 = vsub.f32 %v2203, %v2226
    %v2231 = vsub.f32 %v2208, %v2227
    %v2232 = vmul.f32 %v2228, %v2228
    %v2233 = vmul.f32 %v2229, %v2229
    %v2234 = vmul.f32 %v2230, %v2230
    %v2235 = vmul.f32 %v2231, %v2231
    %v2236 = vsel %vm55, %v2232, 0.0
    %2237 = vadd.xlane.f32.xlu0 %v2236
    %v2238 = vpop.xlane.xlu0 %2237
    %v2239 = vsel %vm55, %v2233, 0.0
    %2240 = vadd.xlane.f32.xlu0 %v2239
    %v2241 = vpop.xlane.xlu0 %2240
    %v2242 = vsel %vm55, %v2234, 0.0
    %2243 = vadd.xlane.f32.xlu0 %v2242
    %v2244 = vpop.xlane.xlu0 %2243
    %v2245 = vsel %vm55, %v2235, 0.0
    %2246 = vadd.xlane.f32.xlu0 %v2245
    %v2247 = vpop.xlane.xlu0 %2246
    %v2248 = vmul.f32 %v2238, %v2223
    %v2249 = vmul.f32 %v2241, %v2223
    %v2250 = vmul.f32 %v2244, %v2223
    %v2251 = vmul.f32 %v2247, %v2223
    %v2252 = vadd.f32 %v2248, 1e-06
    %v2253 = vadd.f32 %v2249, 1e-06
    %v2254 = vadd.f32 %v2250, 1e-06
    %v2255 = vadd.f32 %v2251, 1e-06
    %v2256 = vrsqrt.pop %v2252
    %v2257 = vrsqrt.pop %v2253
    %v2258 = vrsqrt.pop %v2254
    %v2259 = vrsqrt.pop %v2255
    %v2260 = vmul.f32 %v2228, %v2256
    %v2261 = vmul.f32 %v2229, %v2257
    %v2262 = vmul.f32 %v2230, %v2258
    %v2263 = vmul.f32 %v2231, %v2259
    %v2264 = vld [vmem:[%s6] sm:$0x1]
    %v2265 = vlaneseq
    %v2266 = vshrl.u32 %v2265, 7
    %v2267 = vsub.s32 0, %v2266
    %v2268 = vrot.slane %v2264, %v2267
    %v2269 = vmul.f32 %v2260, %v2268
    %v2270 = vmul.f32 %v2261, %v2268
    %v2271 = vadd.f32 %v47, %v2269
    %v2272 = vadd.f32 %v48, %v2270
    %v2273 = vld [vmem:[%s6 + $0x1] sm:$0x1]
    %v2274 = vlaneseq
    %v2275 = vshrl.u32 %v2274, 7
    %v2276 = vsub.s32 0, %v2275
    %v2277 = vrot.slane %v2273, %v2276
    %v2278 = vadd.f32 %v2271, %v2277
    %v2279 = vadd.f32 %v2272, %v2277
    %2280 = vst.msk [vmem:[#allocation5] sm:$0xff] %vm55, %v2278
    %2281 = vst.msk [vmem:[#allocation5 + $0x8] sm:$0xff] %vm55, %v2279
    %v2282 = vld [vmem:[%s6 + $0x2] sm:$0x1]
    %v2283 = vlaneseq
    %v2284 = vshrl.u32 %v2283, 7
    %v2285 = vsub.s32 0, %v2284
    %v2286 = vrot.slane %v2282, %v2285
    %v2287 = vmul.f32 %v2262, %v2286
    %v2288 = vmul.f32 %v2263, %v2286
    %v2289 = vadd.f32 %v49, %v2287
    %v2290 = vadd.f32 %v50, %v2288
    %v2291 = vld [vmem:[%s6 + $0x3] sm:$0x1]
    %v2292 = vlaneseq
    %v2293 = vshrl.u32 %v2292, 7
    %v2294 = vsub.s32 0, %v2293
    %v2295 = vrot.slane %v2291, %v2294
    %v2296 = vadd.f32 %v2289, %v2295
    %v2297 = vadd.f32 %v2290, %v2295
    %2298 = vst.msk [vmem:[#allocation6] sm:$0xff] %vm55, %v2296
    %2299 = vst.msk [vmem:[#allocation6 + $0x8] sm:$0xff] %vm55, %v2297
    // Predicated region
    $region34: #{mm_mamba_encoder_layer.1} parent=1 // pred_check
      _
    $region35: #{mm_mamba_encoder_layer.1} parent=1 // pred_check_branch
      %2301 = sbr.rel (0) target = $region37
    $region36: #{mm_mamba_encoder_layer.1} parent=1 // pred_region
      %s2303 = ssub.s32 256, 256
      %2304 = vsyncadd [#allocation4], %s2303
      %s2305 = sshll.u32 [#allocation5], 4
      %s2306 = int_to_ptr.vmem [resolvable:$true] %s2305
      %2311 = dma.vmem_to_hbm [thread:$0]  %s2306, 256, %s7, [#allocation4], 128, 128, 8
    $region37: #{mm_mamba_encoder_layer.1} parent=1 // pred_fallthru
      _
    // Predicated region
    $region38: #{mm_mamba_encoder_layer.1} parent=1 // pred_check
      _
    $region39: #{mm_mamba_encoder_layer.1} parent=1 // pred_check_branch
      %2313 = sbr.rel (0) target = $region41
    $region40: #{mm_mamba_encoder_layer.1} parent=1 // pred_region
      %s2315 = ssub.s32 256, 256
      %2316 = vsyncadd [#allocation7], %s2315
      %s2317 = sshll.u32 [#allocation6], 4
      %s2318 = int_to_ptr.vmem [resolvable:$true] %s2317
      %2323 = dma.vmem_to_hbm [thread:$0]  %s2318, 256, %s8, [#allocation7], 128, 128, 8
    $region41: #{mm_mamba_encoder_layer.1} parent=1 // pred_fallthru
      _
    // Predicated region
    $region42: #{mm_mamba_encoder_layer.1} parent=1 // pred_check
      _
    $region43: #{mm_mamba_encoder_layer.1} parent=1 // pred_check_branch
      %2325 = sbr.rel (0) target = $region45
    $region44: #{mm_mamba_encoder_layer.1} parent=1 // pred_region
      %2326 = dma.done [#allocation4], 256
    $region45: #{mm_mamba_encoder_layer.1} parent=1 // pred_fallthru
      _
    // Predicated region
    $region46: #{mm_mamba_encoder_layer.1} parent=1 // pred_check
      _
    $region47: #{mm_mamba_encoder_layer.1} parent=1 // pred_check_branch
      %2328 = sbr.rel (0) target = $region49
    $region48: #{mm_mamba_encoder_layer.1} parent=1 // pred_region
      %2329 = dma.done [#allocation7], 256
    $region49: #{mm_mamba_encoder_layer.1} parent=1 // pred_fallthru
      _
    %2330 = vsyncpa [#allocation3], 1
    %2331 = vsyncpa [#allocation4], 1
    %2332 = vsyncpa [#allocation7], 1

</llo_original>
